<compile_context>
chip_gen: v7x
topology: tpu7x:2x2x1
jax: 0.10.0
libtpu: 0.0.40
codegen_flags: <defaults>
</compile_context>

<pallas_src>
import functools

import jax
import jax.numpy as jnp
from jax.experimental import pallas as pl
from jax.experimental.pallas import tpu as pltpu


def _round_up(x, m):
    return ((x + m - 1) // m) * m


def _softplus(x):
    # matches torch.nn.Softplus(beta=1, threshold=20)
    return jnp.where(x > 20.0, x, jnp.log1p(jnp.exp(jnp.minimum(x, 20.0))))


def gating_kernel(x_ref, wconv_ref, bconv_ref, whead_ref, bhead_ref, noise_ref,
                  gates_ref, load_ref, patches_ref, *,
                  H, W, Cin, E, top_k, noise_epsilon):
    """One grid step = one batch element (image)."""
    b = pl.program_id(0)
    HW = H * W
    K_PAD = patches_ref.shape[-1]       # 9*Cin zero-padded to a multiple of 128
    E_PAD = gates_ref.shape[-1]         # expert dim padded to 128 lanes

    # One-time init: zero the im2col scratch (so the K padding lanes stay 0)
    # and the resident `load` accumulator.
    @pl.when(b == 0)
    def _init():
        patches_ref[...] = jnp.zeros_like(patches_ref)
        load_ref[...] = jnp.zeros_like(load_ref)

    xp = x_ref[...]                     # [H+2, W+2, Cin] bf16, spatially zero-padded

    # ---- im2col: write the 9 shifted taps into the lane-padded slab --------
    # patches[y, x, tap*Cin + ci] = xpad[y+ky, x+kx, ci],  tap = ky*3 + kx
    for tap in range(9):
        ky, kx = divmod(tap, 3)
        patches_ref[:, :, tap * Cin:(tap + 1) * Cin] = xp[ky:ky + H, kx:kx + W, :]

    # ---- conv 3x3 as ONE lane-dense MXU matmul (bf16 in, f32 accumulate) ---
    patches = patches_ref[...].reshape(HW, K_PAD)                  # [H*W, K_PAD]
    acc = jnp.dot(patches, wconv_ref[...],
                  preferred_element_type=jnp.float32)              # [H*W, C_PAD]
    acc = jnp.maximum(acc + bconv_ref[...], 0.0)                   # bias + ReLU

    # ---- global average pool (AdaptiveAvgPool2d((1,1))) for this image -----
    pooled = jnp.sum(acc, axis=0, keepdims=True) * (1.0 / HW)      # [1, C_PAD]

    # ---- fused gating heads: [w_gate | w_noise] in one matmul --------------
    head = jnp.dot(pooled, whead_ref[...],
                   preferred_element_type=jnp.float32) + bhead_ref[...]
    clean = head[:, :E]                                            # fc_gate
    raw_noise = head[:, E:2 * E]                                   # fc_noise
    stddev = _softplus(raw_noise) + noise_epsilon
    logits = clean + noise_ref[...] * stddev                       # train=True path

    # ---- top-k (descending; lowest index on exact ties) --------------------
    col = jax.lax.broadcasted_iota(jnp.int32, (1, E), 1)
    work = logits
    top_vals, top_idx = [], []
    for _ in range(top_k):
        mx = jnp.max(work, axis=1, keepdims=True)
        idx = jnp.min(jnp.where(work == mx, col, E), axis=1, keepdims=True)
        top_vals.append(mx)
        top_idx.append(idx)
        work = jnp.where(col == idx, -jnp.inf, work)

    # softmax over the top_k logits
    m = top_vals[0]
    for v in top_vals[1:]:
        m = jnp.maximum(m, v)
    exps = [jnp.exp(v - m) for v in top_vals]
    denom = exps[0]
    for e in exps[1:]:
        denom = denom + e

    # ---- scatter the top-k gates into the lane-padded expert dimension -----
    colp = jax.lax.broadcasted_iota(jnp.int32, (1, E_PAD), 1)
    gates_row = jnp.zeros((1, E_PAD), jnp.float32)
    for k in range(top_k):
        gates_row = gates_row + jnp.where(colp == top_idx[k], exps[k] / denom, 0.0)

    gates_ref[...] = gates_row
    # _gates_to_load: gates.sum(0), reduced over the batch grid axis.
    load_ref[...] += gates_row


def noisy_topk_gating(x_nchw, packed, noise, *, top_k, noise_epsilon=0.01):
    """Returns (gates [B,E], load [E]) — semantics of the module's forward (train=True)."""
    B, Cin, H, W = x_nchw.shape
    E = noise.shape[-1]
    K_PAD, C_PAD = packed["w_conv"].shape
    HEAD_PAD = packed["w_heads"].shape[-1]
    E_PAD = 128
    assert E <= E_PAD and 2 * E <= HEAD_PAD and 9 * Cin <= K_PAD

    # Layout glue: NCHW -> NHWC, zero-pad spatial by 1 (conv padding=1), bf16.
    # Under jit this fuses into a single small copy of x.
    # TODO(synk): fold the transpose/pad into the kernel (masked edge blocks) to
    # drop this extra HBM round trip of x.
    xp = jnp.pad(jnp.transpose(x_nchw, (0, 2, 3, 1)),
                 ((0, 0), (1, 1), (1, 1), (0, 0))).astype(jnp.bfloat16)
    noise3 = noise.reshape(B, 1, E).astype(jnp.float32)

    kernel = functools.partial(gating_kernel, H=H, W=W, Cin=Cin, E=E,
                               top_k=top_k, noise_epsilon=noise_epsilon)

    flops = 2 * B * H * W * K_PAD * C_PAD + 2 * B * C_PAD * HEAD_PAD
    bytes_accessed = (xp.size * 2 + packed["w_conv"].size * 2
                      + (packed["b_conv"].size + packed["w_heads"].size
                         + packed["b_heads"].size + noise3.size) * 4
                      + (B * E_PAD + E_PAD) * 4)
    cost = pl.CostEstimate(flops=flops, transcendentals=B * (E + top_k),
                           bytes_accessed=bytes_accessed)

    gates_p, load_p = pl.pallas_call(
        kernel,
        grid=(B,),
        out_shape=(jax.ShapeDtypeStruct((B, 1, E_PAD), jnp.float32),
                   jax.ShapeDtypeStruct((1, E_PAD), jnp.float32)),
        in_specs=[
            pl.BlockSpec((None, H + 2, W + 2, Cin), lambda b: (b, 0, 0, 0)),  # x (per image)
            pl.BlockSpec((K_PAD, C_PAD), lambda b: (0, 0)),                   # w_conv (resident)
            pl.BlockSpec((1, C_PAD), lambda b: (0, 0)),                       # b_conv
            pl.BlockSpec((C_PAD, HEAD_PAD), lambda b: (0, 0)),                # w_gate|w_noise
            pl.BlockSpec((1, HEAD_PAD), lambda b: (0, 0)),                    # b_gate|b_noise
            pl.BlockSpec((None, 1, E), lambda b: (b, 0, 0)),                  # noise row
        ],
        out_specs=(
            pl.BlockSpec((None, 1, E_PAD), lambda b: (b, 0, 0)),              # gates row
            pl.BlockSpec((1, E_PAD), lambda b: (0, 0)),                       # load (accumulator)
        ),
        scratch_shapes=[pltpu.VMEM((H, W, K_PAD), jnp.bfloat16)],             # im2col slab
        compiler_params=pltpu.CompilerParams(
            # batch is a reduction axis for `load` (resident accumulator) -> "arbitrary".
            dimension_semantics=("arbitrary",),
            vmem_limit_bytes=32 * 1024 * 1024),
        cost_estimate=cost,
    )(xp, packed["w_conv"], packed["b_conv"], packed["w_heads"],
      packed["b_heads"], noise3)

    return gates_p[:, 0, :E], load_p[0, :E]


# ----------------------------- parameters ----------------------------------

def init_params(key, in_channels, expert_num, cout=64):
    """Deterministic synthetic params in 'natural' layouts (HWIO conv weight)."""
    ks = jax.random.split(key, 6)
    return dict(
        w_conv=jax.random.normal(ks[0], (3, 3, in_channels, cout), jnp.float32) * 0.1,
        b_conv=jax.random.normal(ks[1], (cout,), jnp.float32) * 0.1,
        w_gate=jax.random.normal(ks[2], (cout, expert_num), jnp.float32) * 0.1,
        b_gate=jax.random.normal(ks[3], (expert_num,), jnp.float32) * 0.1,
        w_noise=jax.random.normal(ks[4], (cout, expert_num), jnp.float32) * 0.1,
        b_noise=jax.random.normal(ks[5], (expert_num,), jnp.float32) * 0.1)


def pack_params(params, *, expert_num):
    """Pre-pack weights into the lane-dense layouts the kernel consumes."""
    w_conv = params["w_conv"]                      # [3, 3, Cin, Cout] (HWIO)
    kh, kw, cin, cout = w_conv.shape
    E = expert_num
    K = kh * kw * cin
    K_PAD = _round_up(K, 128)
    C_PAD = _round_up(cout, 128)
    HEAD_PAD = _round_up(max(2 * E, 128), 128)

    wc = jnp.zeros((K_PAD, C_PAD), jnp.float32).at[:K, :cout].set(
        w_conv.reshape(K, cout))                   # row = tap*Cin + ci
    bc = jnp.zeros((1, C_PAD), jnp.float32).at[0, :cout].set(params["b_conv"])
    wh = (jnp.zeros((C_PAD, HEAD_PAD), jnp.float32)
          .at[:cout, :E].set(params["w_gate"])
          .at[:cout, E:2 * E].set(params["w_noise"]))
    bh = (jnp.zeros((1, HEAD_PAD), jnp.float32)
          .at[0, :E].set(params["b_gate"])
          .at[0, E:2 * E].set(params["b_noise"]))
    return dict(w_conv=wc.astype(jnp.bfloat16), b_conv=bc, w_heads=wh, b_heads=bh)


# --------------------------- pure-JAX reference -----------------------------

def reference_forward(x_nchw, params, noise, *, top_k, noise_epsilon=0.01):
    """Non-Pallas forward of the module (same bf16 conv precision as the kernel)."""
    conv = jax.lax.conv_general_dilated(
        x_nchw.astype(jnp.bfloat16), params["w_conv"].astype(jnp.bfloat16),
        window_strides=(1, 1), padding=((1, 1), (1, 1)),
        dimension_numbers=("NCHW", "HWIO", "NCHW"),
        preferred_element_type=jnp.float32)
    conv = jax.nn.relu(conv + params["b_conv"][None, :, None, None])
    pooled = jnp.mean(conv, axis=(2, 3))                           # [B, Cout]
    clean = pooled @ params["w_gate"] + params["b_gate"]
    raw = pooled @ params["w_noise"] + params["b_noise"]
    std = jax.nn.softplus(raw) + noise_epsilon
    logits = clean + noise * std
    B, E = logits.shape
    top_vals, top_idx = jax.lax.top_k(logits, min(top_k + 1, E))
    top_vals, top_idx = top_vals[:, :top_k], top_idx[:, :top_k]
    probs = jax.nn.softmax(top_vals, axis=1)
    gates = jnp.zeros_like(logits).at[jnp.arange(B)[:, None], top_idx].set(probs)
    return gates, gates.sum(0)


if __name__ == "__main__":
    key = jax.random.PRNGKey(0)
    kx, kp, kn = jax.random.split(key, 3)

    B, C, H, W = 2, 4, 16, 16
    EXPERT_NUM, TOP_K = 8, 2

    x = jax.random.normal(kx, (B, C, H, W), jnp.float32)          # PyTorch-style NCHW input
    params = init_params(kp, C, EXPERT_NUM)
    packed = pack_params(params, expert_num=EXPERT_NUM)
    # train=True path: torch.randn_like(clean_logits) supplied as an explicit input
    noise = jax.random.normal(kn, (B, EXPERT_NUM), jnp.float32)

    fwd = jax.jit(functools.partial(noisy_topk_gating, top_k=TOP_K))
    gates, load = fwd(x, packed, noise)
    jax.block_until_ready((gates, load))

    assert gates.shape == (B, EXPERT_NUM) and load.shape == (EXPERT_NUM,)
    # each row's top-k gates form a softmax (sum to 1); load == gates.sum(0)
    assert jnp.allclose(gates.sum(axis=1), 1.0, atol=1e-5)
    assert jnp.allclose(load, gates.sum(axis=0), atol=1e-5)

    # cross-check the fused kernel against a pure-JAX forward of the module
    g_ref, l_ref = reference_forward(x, params, noise, top_k=TOP_K)
    assert jnp.allclose(gates, g_ref, atol=2e-3), float(jnp.abs(gates - g_ref).max())
    assert jnp.allclose(load, l_ref, atol=2e-3), float(jnp.abs(load - l_ref).max())

    print("KERNEL_OK")
</pallas_src>

<mosaic_0001>
module attributes {stable_mosaic.version = 11 : i64} {
  func.func @gating_kernel(%arg0: i32, %arg1: memref<1x18x18x4xbf16, #tpu.memory_space<vmem>>, %arg2: memref<128x128xbf16, #tpu.memory_space<vmem>>, %arg3: memref<1x128xf32, #tpu.memory_space<vmem>>, %arg4: memref<128x128xf32, #tpu.memory_space<vmem>>, %arg5: memref<1x128xf32, #tpu.memory_space<vmem>>, %arg6: memref<1x1x8xf32, #tpu.memory_space<vmem>>, %arg7: memref<1x1x128xf32, #tpu.memory_space<vmem>>, %arg8: memref<1x128xf32, #tpu.memory_space<vmem>>, %arg9: memref<16x16x128xbf16, #tpu.memory_space<vmem>>) attributes {dimension_semantics = [#tpu.dimension_semantics<arbitrary>], iteration_bounds = array<i64: 2>, scalar_prefetch = 0 : i64, scratch_operands = 1 : i64, tpu.core_type = #tpu.core_type<tc>, window_params = [{transform_indices = @transform_0, window_bounds = array<i64: 1, 18, 18, 4>}, {pipeline_mode = #tpu.pipeline_mode<synchronous>, transform_indices = @transform_1, window_bounds = array<i64: 128, 128>}, {pipeline_mode = #tpu.pipeline_mode<synchronous>, transform_indices = @transform_2, window_bounds = array<i64: 1, 128>}, {pipeline_mode = #tpu.pipeline_mode<synchronous>, transform_indices = @transform_3, window_bounds = array<i64: 128, 128>}, {pipeline_mode = #tpu.pipeline_mode<synchronous>, transform_indices = @transform_4, window_bounds = array<i64: 1, 128>}, {transform_indices = @transform_5, window_bounds = array<i64: 1, 1, 8>}, {transform_indices = @transform_6, window_bounds = array<i64: 1, 1, 128>}, {pipeline_mode = #tpu.pipeline_mode<synchronous>, transform_indices = @transform_7, window_bounds = array<i64: 1, 128>}]} {
    %c0_i32 = arith.constant 0 : i32
    %0 = arith.cmpi eq, %arg0, %c0_i32 : i32
    %1 = arith.extui %0 : i1 to i32
    %c0_i32_0 = arith.constant 0 : i32
    %2 = arith.cmpi ne, %1, %c0_i32_0 : i32
    scf.if %2 {
      %cst_60 = arith.constant 0.000000e+00 : bf16
      %106 = vector.broadcast %cst_60 : bf16 to vector<16x16x128xbf16>
      %c0_61 = arith.constant 0 : index
      %c0_62 = arith.constant 0 : index
      %c0_63 = arith.constant 0 : index
      %107 = vector.load %arg9[%c0_61, %c0_62, %c0_63] : memref<16x16x128xbf16, #tpu.memory_space<vmem>>, vector<16x16x128xbf16>
      tpu.vector_store %arg9[%c0_61, %c0_62, %c0_63], %106 {strides = array<i32>} : memref<16x16x128xbf16, #tpu.memory_space<vmem>>, vector<16x16x128xbf16>,
      %cst_64 = arith.constant 0.000000e+00 : f32
      %108 = vector.broadcast %cst_64 : f32 to vector<1x128xf32>
      %c0_65 = arith.constant 0 : index
      %c0_66 = arith.constant 0 : index
      %109 = vector.load %arg8[%c0_65, %c0_66] : memref<1x128xf32, #tpu.memory_space<vmem>>, vector<1x128xf32>
      tpu.vector_store %arg8[%c0_65, %c0_66], %108 {strides = array<i32>} : memref<1x128xf32, #tpu.memory_space<vmem>>, vector<1x128xf32>,
    } else {
    }
    %c0 = arith.constant 0 : index
    %c0_1 = arith.constant 0 : index
    %c0_2 = arith.constant 0 : index
    %c0_3 = arith.constant 0 : index
    %3 = vector.load %arg1[%c0, %c0_1, %c0_2, %c0_3] : memref<1x18x18x4xbf16, #tpu.memory_space<vmem>>, vector<1x18x18x4xbf16>
    %4 = vector.shape_cast %3 : vector<1x18x18x4xbf16> to vector<18x18x4xbf16>
    %5 = vector.extract_strided_slice %4 {offsets = [0, 0, 0], sizes = [16, 16, 4], strides = [1, 1, 1]} : vector<18x18x4xbf16> to vector<16x16x4xbf16>
    %c0_4 = arith.constant 0 : index
    %c0_5 = arith.constant 0 : index
    %c0_6 = arith.constant 0 : index
    %6 = vector.load %arg9[%c0_4, %c0_5, %c0_6] : memref<16x16x128xbf16, #tpu.memory_space<vmem>>, vector<16x16x4xbf16>
    tpu.vector_store %arg9[%c0_4, %c0_5, %c0_6], %5 {strides = array<i32>} : memref<16x16x128xbf16, #tpu.memory_space<vmem>>, vector<16x16x4xbf16>,
    %7 = vector.extract_strided_slice %4 {offsets = [0, 1, 0], sizes = [16, 16, 4], strides = [1, 1, 1]} : vector<18x18x4xbf16> to vector<16x16x4xbf16>
    %c0_7 = arith.constant 0 : index
    %c0_8 = arith.constant 0 : index
    %c4 = arith.constant 4 : index
    %8 = vector.load %arg9[%c0_7, %c0_8, %c4] : memref<16x16x128xbf16, #tpu.memory_space<vmem>>, vector<16x16x4xbf16>
    tpu.vector_store %arg9[%c0_7, %c0_8, %c4], %7 {strides = array<i32>} : memref<16x16x128xbf16, #tpu.memory_space<vmem>>, vector<16x16x4xbf16>,
    %9 = vector.extract_strided_slice %4 {offsets = [0, 2, 0], sizes = [16, 16, 4], strides = [1, 1, 1]} : vector<18x18x4xbf16> to vector<16x16x4xbf16>
    %c0_9 = arith.constant 0 : index
    %c0_10 = arith.constant 0 : index
    %c8 = arith.constant 8 : index
    %10 = vector.load %arg9[%c0_9, %c0_10, %c8] : memref<16x16x128xbf16, #tpu.memory_space<vmem>>, vector<16x16x4xbf16>
    tpu.vector_store %arg9[%c0_9, %c0_10, %c8], %9 {strides = array<i32>} : memref<16x16x128xbf16, #tpu.memory_space<vmem>>, vector<16x16x4xbf16>,
    %11 = vector.extract_strided_slice %4 {offsets = [1, 0, 0], sizes = [16, 16, 4], strides = [1, 1, 1]} : vector<18x18x4xbf16> to vector<16x16x4xbf16>
    %c0_11 = arith.constant 0 : index
    %c0_12 = arith.constant 0 : index
    %c12 = arith.constant 12 : index
    %12 = vector.load %arg9[%c0_11, %c0_12, %c12] : memref<16x16x128xbf16, #tpu.memory_space<vmem>>, vector<16x16x4xbf16>
    tpu.vector_store %arg9[%c0_11, %c0_12, %c12], %11 {strides = array<i32>} : memref<16x16x128xbf16, #tpu.memory_space<vmem>>, vector<16x16x4xbf16>,
    %13 = vector.extract_strided_slice %4 {offsets = [1, 1, 0], sizes = [16, 16, 4], strides = [1, 1, 1]} : vector<18x18x4xbf16> to vector<16x16x4xbf16>
    %c0_13 = arith.constant 0 : index
    %c0_14 = arith.constant 0 : index
    %c16 = arith.constant 16 : index
    %14 = vector.load %arg9[%c0_13, %c0_14, %c16] : memref<16x16x128xbf16, #tpu.memory_space<vmem>>, vector<16x16x4xbf16>
    tpu.vector_store %arg9[%c0_13, %c0_14, %c16], %13 {strides = array<i32>} : memref<16x16x128xbf16, #tpu.memory_space<vmem>>, vector<16x16x4xbf16>,
    %15 = vector.extract_strided_slice %4 {offsets = [1, 2, 0], sizes = [16, 16, 4], strides = [1, 1, 1]} : vector<18x18x4xbf16> to vector<16x16x4xbf16>
    %c0_15 = arith.constant 0 : index
    %c0_16 = arith.constant 0 : index
    %c20 = arith.constant 20 : index
    %16 = vector.load %arg9[%c0_15, %c0_16, %c20] : memref<16x16x128xbf16, #tpu.memory_space<vmem>>, vector<16x16x4xbf16>
    tpu.vector_store %arg9[%c0_15, %c0_16, %c20], %15 {strides = array<i32>} : memref<16x16x128xbf16, #tpu.memory_space<vmem>>, vector<16x16x4xbf16>,
    %17 = vector.extract_strided_slice %4 {offsets = [2, 0, 0], sizes = [16, 16, 4], strides = [1, 1, 1]} : vector<18x18x4xbf16> to vector<16x16x4xbf16>
    %c0_17 = arith.constant 0 : index
    %c0_18 = arith.constant 0 : index
    %c24 = arith.constant 24 : index
    %18 = vector.load %arg9[%c0_17, %c0_18, %c24] : memref<16x16x128xbf16, #tpu.memory_space<vmem>>, vector<16x16x4xbf16>
    tpu.vector_store %arg9[%c0_17, %c0_18, %c24], %17 {strides = array<i32>} : memref<16x16x128xbf16, #tpu.memory_space<vmem>>, vector<16x16x4xbf16>,
    %19 = vector.extract_strided_slice %4 {offsets = [2, 1, 0], sizes = [16, 16, 4], strides = [1, 1, 1]} : vector<18x18x4xbf16> to vector<16x16x4xbf16>
    %c0_19 = arith.constant 0 : index
    %c0_20 = arith.constant 0 : index
    %c28 = arith.constant 28 : index
    %20 = vector.load %arg9[%c0_19, %c0_20, %c28] : memref<16x16x128xbf16, #tpu.memory_space<vmem>>, vector<16x16x4xbf16>
    tpu.vector_store %arg9[%c0_19, %c0_20, %c28], %19 {strides = array<i32>} : memref<16x16x128xbf16, #tpu.memory_space<vmem>>, vector<16x16x4xbf16>,
    %21 = vector.extract_strided_slice %4 {offsets = [2, 2, 0], sizes = [16, 16, 4], strides = [1, 1, 1]} : vector<18x18x4xbf16> to vector<16x16x4xbf16>
    %c0_21 = arith.constant 0 : index
    %c0_22 = arith.constant 0 : index
    %c32 = arith.constant 32 : index
    %22 = vector.load %arg9[%c0_21, %c0_22, %c32] : memref<16x16x128xbf16, #tpu.memory_space<vmem>>, vector<16x16x4xbf16>
    tpu.vector_store %arg9[%c0_21, %c0_22, %c32], %21 {strides = array<i32>} : memref<16x16x128xbf16, #tpu.memory_space<vmem>>, vector<16x16x4xbf16>,
    %c0_23 = arith.constant 0 : index
    %c0_24 = arith.constant 0 : index
    %c0_25 = arith.constant 0 : index
    %23 = vector.load %arg9[%c0_23, %c0_24, %c0_25] : memref<16x16x128xbf16, #tpu.memory_space<vmem>>, vector<16x16x128xbf16>
    %24 = vector.shape_cast %23 : vector<16x16x128xbf16> to vector<256x128xbf16>
    %c0_26 = arith.constant 0 : index
    %c0_27 = arith.constant 0 : index
    %25 = vector.load %arg2[%c0_26, %c0_27] : memref<128x128xbf16, #tpu.memory_space<vmem>>, vector<128x128xbf16>
    %cst = arith.constant dense<0.000000e+00> : vector<256x128xf32>
    %26 = tpu.matmul %24, %25, %cst {dimension_numbers = #tpu.dot_dimension_numbers<[1], [0], [0], [1], [0, 0, 1, 1], [], []>} : vector<256x128xbf16>, vector<128x128xbf16>, vector<256x128xf32> -> vector<256x128xf32>
    %c0_28 = arith.constant 0 : index
    %c0_29 = arith.constant 0 : index
    %27 = vector.load %arg3[%c0_28, %c0_29] : memref<1x128xf32, #tpu.memory_space<vmem>>, vector<1x128xf32>
    %28 = vector.broadcast %27 : vector<1x128xf32> to vector<256x128xf32>
    %29 = arith.addf %26, %28 : vector<256x128xf32>
    %cst_30 = arith.constant 0.000000e+00 : f32
    %30 = vector.broadcast %cst_30 : f32 to vector<256x128xf32>
    %31 = arith.maximumf %29, %30 : vector<256x128xf32>
    %cst_31 = arith.constant dense<0.000000e+00> : vector<128xf32>
    %32 = vector.multi_reduction <add>, %31, %cst_31 [0] : vector<256x128xf32> to vector<128xf32>
    %33 = vector.shape_cast %32 : vector<128xf32> to vector<1x128xf32>
    %cst_32 = arith.constant 3.906250e-03 : f32
    %34 = vector.broadcast %cst_32 : f32 to vector<1x128xf32>
    %35 = arith.mulf %33, %34 : vector<1x128xf32>
    %c0_33 = arith.constant 0 : index
    %c0_34 = arith.constant 0 : index
    %36 = vector.load %arg4[%c0_33, %c0_34] : memref<128x128xf32, #tpu.memory_space<vmem>>, vector<128x128xf32>
    %cst_35 = arith.constant dense<0.000000e+00> : vector<1x128xf32>
    %37 = tpu.matmul %35, %36, %cst_35 {dimension_numbers = #tpu.dot_dimension_numbers<[1], [0], [0], [1], [0, 0, 1, 1], [], []>} : vector<1x128xf32>, vector<128x128xf32>, vector<1x128xf32> -> vector<1x128xf32>
    %c0_36 = arith.constant 0 : index
    %c0_37 = arith.constant 0 : index
    %38 = vector.load %arg5[%c0_36, %c0_37] : memref<1x128xf32, #tpu.memory_space<vmem>>, vector<1x128xf32>
    %39 = arith.addf %37, %38 : vector<1x128xf32>
    %40 = vector.extract_strided_slice %39 {offsets = [0, 0], sizes = [1, 8], strides = [1, 1]} : vector<1x128xf32> to vector<1x8xf32>
    %41 = vector.extract_strided_slice %39 {offsets = [0, 8], sizes = [1, 8], strides = [1, 1]} : vector<1x128xf32> to vector<1x8xf32>
    %cst_38 = arith.constant 2.000000e+01 : f32
    %42 = vector.broadcast %cst_38 : f32 to vector<1x8xf32>
    %43 = arith.cmpf ogt, %41, %42 : vector<1x8xf32>
    %cst_39 = arith.constant 2.000000e+01 : f32
    %44 = vector.broadcast %cst_39 : f32 to vector<1x8xf32>
    %45 = arith.minimumf %41, %44 : vector<1x8xf32>
    %46 = math.exp %45 : vector<1x8xf32>
    %47 = math.log1p %46 : vector<1x8xf32>
    %48 = arith.select %43, %41, %47 : vector<1x8xi1>, vector<1x8xf32>
    %cst_40 = arith.constant 0.00999999977 : f32
    %49 = vector.broadcast %cst_40 : f32 to vector<1x8xf32>
    %50 = arith.addf %48, %49 : vector<1x8xf32>
    %c0_41 = arith.constant 0 : index
    %c0_42 = arith.constant 0 : index
    %c0_43 = arith.constant 0 : index
    %51 = vector.load %arg6[%c0_41, %c0_42, %c0_43] : memref<1x1x8xf32, #tpu.memory_space<vmem>>, vector<1x1x8xf32>
    %52 = vector.shape_cast %51 : vector<1x1x8xf32> to vector<1x8xf32>
    %53 = arith.mulf %52, %50 : vector<1x8xf32>
    %54 = arith.addf %40, %53 : vector<1x8xf32>
    %55 = tpu.iota {dimensions = array<i32: 1>} : vector<1x8xi32>
    %cst_44 = arith.constant dense<0xFF800000> : vector<1xf32>
    %56 = vector.multi_reduction <maximumf>, %54, %cst_44 [1] : vector<1x8xf32> to vector<1xf32>
    %57 = vector.shape_cast %56 : vector<1xf32> to vector<1x1xf32>
    %58 = vector.broadcast %57 : vector<1x1xf32> to vector<1x8xf32>
    %59 = arith.cmpf oeq, %54, %58 : vector<1x8xf32>
    %c8_i32 = arith.constant 8 : i32
    %60 = vector.broadcast %c8_i32 : i32 to vector<1x8xi32>
    %61 = arith.select %59, %55, %60 : vector<1x8xi1>, vector<1x8xi32>
    %cst_45 = arith.constant dense<2147483647> : vector<1xi32>
    %62 = vector.multi_reduction <minsi>, %61, %cst_45 [1] : vector<1x8xi32> to vector<1xi32>
    %63 = vector.shape_cast %62 : vector<1xi32> to vector<1x1xi32>
    %64 = vector.broadcast %63 : vector<1x1xi32> to vector<1x8xi32>
    %65 = arith.cmpi eq, %55, %64 : vector<1x8xi32>
    %cst_46 = arith.constant 0xFF800000 : f32
    %66 = vector.broadcast %cst_46 : f32 to vector<1x8xf32>
    %67 = arith.select %65, %66, %54 : vector<1x8xi1>, vector<1x8xf32>
    %cst_47 = arith.constant dense<0xFF800000> : vector<1xf32>
    %68 = vector.multi_reduction <maximumf>, %67, %cst_47 [1] : vector<1x8xf32> to vector<1xf32>
    %69 = vector.shape_cast %68 : vector<1xf32> to vector<1x1xf32>
    %70 = vector.broadcast %69 : vector<1x1xf32> to vector<1x8xf32>
    %71 = arith.cmpf oeq, %67, %70 : vector<1x8xf32>
    %c8_i32_48 = arith.constant 8 : i32
    %72 = vector.broadcast %c8_i32_48 : i32 to vector<1x8xi32>
    %73 = arith.select %71, %55, %72 : vector<1x8xi1>, vector<1x8xi32>
    %cst_49 = arith.constant dense<2147483647> : vector<1xi32>
    %74 = vector.multi_reduction <minsi>, %73, %cst_49 [1] : vector<1x8xi32> to vector<1xi32>
    %75 = vector.shape_cast %74 : vector<1xi32> to vector<1x1xi32>
    %76 = arith.maximumf %57, %69 : vector<1x1xf32>
    %77 = arith.subf %57, %76 : vector<1x1xf32>
    %78 = math.exp %77 : vector<1x1xf32>
    %79 = arith.subf %69, %76 : vector<1x1xf32>
    %80 = math.exp %79 : vector<1x1xf32>
    %81 = arith.addf %78, %80 : vector<1x1xf32>
    %82 = tpu.iota {dimensions = array<i32: 1>} : vector<1x128xi32>
    %cst_50 = arith.constant 0.000000e+00 : f32
    %83 = vector.broadcast %cst_50 : f32 to vector<1x128xf32>
    %84 = vector.broadcast %63 : vector<1x1xi32> to vector<1x128xi32>
    %85 = arith.cmpi eq, %82, %84 : vector<1x128xi32>
    %86 = arith.divf %78, %81 : vector<1x1xf32>
    %cst_51 = arith.constant 0.000000e+00 : f32
    %87 = vector.shape_cast %86 : vector<1x1xf32> to vector<1x1xf32>
    %88 = vector.broadcast %87 : vector<1x1xf32> to vector<1x128xf32>
    %89 = vector.broadcast %cst_51 : f32 to vector<1x128xf32>
    %90 = arith.select %85, %88, %89 : vector<1x128xi1>, vector<1x128xf32>
    %91 = arith.addf %83, %90 : vector<1x128xf32>
    %92 = vector.broadcast %75 : vector<1x1xi32> to vector<1x128xi32>
    %93 = arith.cmpi eq, %82, %92 : vector<1x128xi32>
    %94 = arith.divf %80, %81 : vector<1x1xf32>
    %cst_52 = arith.constant 0.000000e+00 : f32
    %95 = vector.shape_cast %94 : vector<1x1xf32> to vector<1x1xf32>
    %96 = vector.broadcast %95 : vector<1x1xf32> to vector<1x128xf32>
    %97 = vector.broadcast %cst_52 : f32 to vector<1x128xf32>
    %98 = arith.select %93, %96, %97 : vector<1x128xi1>, vector<1x128xf32>
    %99 = arith.addf %91, %98 : vector<1x128xf32>
    %c0_53 = arith.constant 0 : index
    %c0_54 = arith.constant 0 : index
    %c0_55 = arith.constant 0 : index
    %100 = vector.load %arg7[%c0_53, %c0_54, %c0_55] : memref<1x1x128xf32, #tpu.memory_space<vmem>>, vector<1x1x128xf32>
    %101 = vector.shape_cast %100 : vector<1x1x128xf32> to vector<1x128xf32>
    %102 = vector.shape_cast %99 : vector<1x128xf32> to vector<1x1x128xf32>
    tpu.vector_store %arg7[%c0_53, %c0_54, %c0_55], %102 {strides = array<i32>} : memref<1x1x128xf32, #tpu.memory_space<vmem>>, vector<1x1x128xf32>,
    %c0_56 = arith.constant 0 : index
    %c0_57 = arith.constant 0 : index
    %103 = vector.load %arg8[%c0_56, %c0_57] : memref<1x128xf32, #tpu.memory_space<vmem>>, vector<1x128xf32>
    %104 = arith.addf %103, %99 : vector<1x128xf32>
    %c0_58 = arith.constant 0 : index
    %c0_59 = arith.constant 0 : index
    %105 = vector.load %arg8[%c0_58, %c0_59] : memref<1x128xf32, #tpu.memory_space<vmem>>, vector<1x128xf32>
    tpu.vector_store %arg8[%c0_58, %c0_59], %104 {strides = array<i32>} : memref<1x128xf32, #tpu.memory_space<vmem>>, vector<1x128xf32>,
    return
  }
  func.func @transform_0(%arg0: i32) -> (i32, i32, i32, i32) {
    %c0_i32 = arith.constant 0 : i32
    %c0_i32_0 = arith.constant 0 : i32
    %c0_i32_1 = arith.constant 0 : i32
    %c0_i32_2 = arith.constant 0 : i32
    return %arg0, %c0_i32, %c0_i32_0, %c0_i32_1 : i32, i32, i32, i32
  }
  func.func @transform_1(%arg0: i32) -> (i32, i32) {
    %c0_i32 = arith.constant 0 : i32
    %c0_i32_0 = arith.constant 0 : i32
    %c0_i32_1 = arith.constant 0 : i32
    return %c0_i32, %c0_i32_0 : i32, i32
  }
  func.func @transform_2(%arg0: i32) -> (i32, i32) {
    %c0_i32 = arith.constant 0 : i32
    %c0_i32_0 = arith.constant 0 : i32
    %c0_i32_1 = arith.constant 0 : i32
    return %c0_i32, %c0_i32_0 : i32, i32
  }
  func.func @transform_3(%arg0: i32) -> (i32, i32) {
    %c0_i32 = arith.constant 0 : i32
    %c0_i32_0 = arith.constant 0 : i32
    %c0_i32_1 = arith.constant 0 : i32
    return %c0_i32, %c0_i32_0 : i32, i32
  }
  func.func @transform_4(%arg0: i32) -> (i32, i32) {
    %c0_i32 = arith.constant 0 : i32
    %c0_i32_0 = arith.constant 0 : i32
    %c0_i32_1 = arith.constant 0 : i32
    return %c0_i32, %c0_i32_0 : i32, i32
  }
  func.func @transform_5(%arg0: i32) -> (i32, i32, i32) {
    %c0_i32 = arith.constant 0 : i32
    %c0_i32_0 = arith.constant 0 : i32
    %c0_i32_1 = arith.constant 0 : i32
    return %arg0, %c0_i32, %c0_i32_0 : i32, i32, i32
  }
  func.func @transform_6(%arg0: i32) -> (i32, i32, i32) {
    %c0_i32 = arith.constant 0 : i32
    %c0_i32_0 = arith.constant 0 : i32
    %c0_i32_1 = arith.constant 0 : i32
    return %arg0, %c0_i32, %c0_i32_0 : i32, i32, i32
  }
  func.func @transform_7(%arg0: i32) -> (i32, i32) {
    %c0_i32 = arith.constant 0 : i32
    %c0_i32_0 = arith.constant 0 : i32
    %c0_i32_1 = arith.constant 0 : i32
    return %c0_i32, %c0_i32_0 : i32, i32
  }
}

</mosaic_0001>

<llo_original>
// kernel: noisy_topk_gating.1
$region0: #{noisy_topk_gating.1}
  #allocation0 [shape = 'u32[]', space=smem, size = 0x4, offset = 0x4, fixed_abs, tag = 'smem constant byte address 0x4 - core index']
  #allocation1 [shape = 'u32[144,128]{1,0:T(1,128)}', space=vmem, size = 0x12000, scoped, tag = 'internal scratch']
  #allocation2 [shape = 'bf16[16,16,128]{2,1,0:T(16,128)(2,1)}', space=vmem, size = 0x10000, scoped, tag = 'scratch operand']
  %s0 = inlined_call_operand.vmem [shape: bf16[2,18,18,4], index: 0, kind: input, shape index: {}]
  %s1 = inlined_call_operand.vmem [shape: bf16[128,128], index: 1, kind: input, shape index: {}]
  %s2 = inlined_call_operand.vmem [shape: f32[1,128], index: 2, kind: input, shape index: {}]
  %s3 = inlined_call_operand.vmem [shape: f32[128,128], index: 3, kind: input, shape index: {}]
  %s4 = inlined_call_operand.vmem [shape: f32[1,128], index: 4, kind: input, shape index: {}]
  %s5 = inlined_call_operand.vmem [shape: f32[2,1,8], index: 5, kind: input, shape index: {}]
  %s6 = inlined_call_operand.hbm [shape: f32[2,1,128], index: 6, kind: output, shape index: {0}]
  %s7 = inlined_call_operand.vmem [shape: f32[1,128], index: 7, kind: output, shape index: {1}]
  %8 = xla_tuple %s6, %s7
  %s9 = sld [smem:[#allocation0]]
  $region69: #{noisy_topk_gating.1} parent=0
    _
  %s11 = ssub.s32 1, %s9
  %s12 = scalar_select 0, %s11, %s9
  $region1: #{noisy_topk_gating.1} parent=0
    #allocation3 [shape = 'u8[1024]{0}', space=vmem, size = 0x400, scoped, tag = 'output window, operand 0']
    #allocation4 [shape = 's32[2]{0}', space=sflag, size = 0x8, scoped, tag = 'scoped memory for noisy_topk_gating.1']
    %13 = vsyncpa [#allocation4], 0
    %s14 = scalar_lea.sflag [#allocation4], 1
    %15 = vsyncpa %s14, 0
    loop: start=0, step=1, limit=4
    $region2: #{noisy_topk_gating.1} parent=1 // loop_pre_header
      _
    $region3: #{noisy_topk_gating.1} parent=1 // loop_header
      %s17 = sphi 0, %s21
      %p18 = scmp.ge.s32.totalorder %s17, 4
      %s27 = sphi 0, %s29
      %s30 = sphi 0, %s27
      %s31 = sphi 0, %s30
      %s47 = sphi 0, %s31
      %s51 = sphi 0, %s51
      %s53 = sphi 0, %s51
      %s54 = sphi 0, %s53
      %s68 = sphi 0, %s54
      %s72 = sphi 0, %s72
      %s74 = sphi 0, %s72
      %s75 = sphi 0, %s74
      %s89 = sphi 0, %s75
      %s93 = sphi 0, %s93
      %s95 = sphi 0, %s93
      %s96 = sphi 0, %s95
      %s110 = sphi 0, %s96
      %s114 = sphi 0, %s114
      %s116 = sphi 0, %s114
      %s117 = sphi 0, %s116
      %s131 = sphi 0, %s117
      %s137 = sphi 0, %s139
      %s140 = sphi 0, %s137
      %s141 = sphi 0, %s140
      %s157 = sphi 0, %s141
      %s163 = sphi 0, %s165
      %s166 = sphi 0, %s163
      %s167 = sphi 0, %s166
      %s183 = sphi 0, %s167
      %s187 = sphi 0, %s187
      %s189 = sphi 0, %s187
      %s190 = sphi 0, %s189
      %s204 = sphi 0, %s190
    $region4: #{noisy_topk_gating.1} parent=1 // loop_header_branch
      %20 = sbr.rel (%p18) target = $region8
    $region5: #{noisy_topk_gating.1} parent=1 // loop_body
      %s22 = ssub.s32 %s17, 1
      %s23 = ssub.s32 %s17, 2
      %s24 = sadd.s32 %s17, 1
      %s25 = ssub.s32 %s17, %s24
      %p26 = scmp.eq.s32.totalorder %s25, 0
      %s28 = sadd.s32 %s27, 1
      %s29 = scalar_select %p26, %s27, %s28
      %p32 = pneg %p26
      %p33 = scmp.eq.s32.totalorder %s17, 1
      %p34 = por %p32, %p33
      %p35 = scmp.ne.s32.totalorder %s27, %s30
      %p36 = scmp.eq.s32.totalorder %s17, 0
      %p37 = por %p35, %p36
      %p38 = scmp.ne.s32.totalorder %s27, %s30
      %p39 = scmp.eq.s32.totalorder %s22, 1
      %p40 = por %p38, %p39
      %p41 = scmp.ne.s32.totalorder %s30, %s31
      %p42 = scmp.eq.s32.totalorder %s22, 0
      %p43 = por %p41, %p42
      %p44 = scmp.ne.s32.totalorder %s30, %s31
      %p45 = scmp.eq.s32.totalorder %s23, 1
      %p46 = por %p44, %p45
      %p48 = scmp.ne.s32.totalorder %s31, %s47
      %p49 = scmp.eq.s32.totalorder %s23, 0
      %p50 = por %p48, %p49
      %s52 = sadd.s32 %s51, 1
      %p55 = scmp.eq.s32.totalorder %s17, 1
      %p56 = scmp.ne.s32.totalorder %s51, %s53
      %p57 = scmp.eq.s32.totalorder %s17, 0
      %p58 = por %p56, %p57
      %p59 = scmp.ne.s32.totalorder %s51, %s53
      %p60 = scmp.eq.s32.totalorder %s22, 1
      %p61 = por %p59, %p60
      %p62 = scmp.ne.s32.totalorder %s53, %s54
      %p63 = scmp.eq.s32.totalorder %s22, 0
      %p64 = por %p62, %p63
      %p65 = scmp.ne.s32.totalorder %s53, %s54
      %p66 = scmp.eq.s32.totalorder %s23, 1
      %p67 = por %p65, %p66
      %p69 = scmp.ne.s32.totalorder %s54, %s68
      %p70 = scmp.eq.s32.totalorder %s23, 0
      %p71 = por %p69, %p70
      %s73 = sadd.s32 %s72, 1
      %p76 = scmp.eq.s32.totalorder %s17, 1
      %p77 = scmp.ne.s32.totalorder %s72, %s74
      %p78 = scmp.eq.s32.totalorder %s17, 0
      %p79 = por %p77, %p78
      %p80 = scmp.ne.s32.totalorder %s72, %s74
      %p81 = scmp.eq.s32.totalorder %s22, 1
      %p82 = por %p80, %p81
      %p83 = scmp.ne.s32.totalorder %s74, %s75
      %p84 = scmp.eq.s32.totalorder %s22, 0
      %p85 = por %p83, %p84
      %p86 = scmp.ne.s32.totalorder %s74, %s75
      %p87 = scmp.eq.s32.totalorder %s23, 1
      %p88 = por %p86, %p87
      %p90 = scmp.ne.s32.totalorder %s75, %s89
      %p91 = scmp.eq.s32.totalorder %s23, 0
      %p92 = por %p90, %p91
      %s94 = sadd.s32 %s93, 1
      %p97 = scmp.eq.s32.totalorder %s17, 1
      %p98 = scmp.ne.s32.totalorder %s93, %s95
      %p99 = scmp.eq.s32.totalorder %s17, 0
      %p100 = por %p98, %p99
      %p101 = scmp.ne.s32.totalorder %s93, %s95
      %p102 = scmp.eq.s32.totalorder %s22, 1
      %p103 = por %p101, %p102
      %p104 = scmp.ne.s32.totalorder %s95, %s96
      %p105 = scmp.eq.s32.totalorder %s22, 0
      %p106 = por %p104, %p105
      %p107 = scmp.ne.s32.totalorder %s95, %s96
      %p108 = scmp.eq.s32.totalorder %s23, 1
      %p109 = por %p107, %p108
      %p111 = scmp.ne.s32.totalorder %s96, %s110
      %p112 = scmp.eq.s32.totalorder %s23, 0
      %p113 = por %p111, %p112
      %s115 = sadd.s32 %s114, 1
      %p118 = scmp.eq.s32.totalorder %s17, 1
      %p119 = scmp.ne.s32.totalorder %s114, %s116
      %p120 = scmp.eq.s32.totalorder %s17, 0
      %p121 = por %p119, %p120
      %p122 = scmp.ne.s32.totalorder %s114, %s116
      %p123 = scmp.eq.s32.totalorder %s22, 1
      %p124 = por %p122, %p123
      %p125 = scmp.ne.s32.totalorder %s116, %s117
      %p126 = scmp.eq.s32.totalorder %s22, 0
      %p127 = por %p125, %p126
      %p128 = scmp.ne.s32.totalorder %s116, %s117
      %p129 = scmp.eq.s32.totalorder %s23, 1
      %p130 = por %p128, %p129
      %p132 = scmp.ne.s32.totalorder %s117, %s131
      %p133 = scmp.eq.s32.totalorder %s23, 0
      %p134 = por %p132, %p133
      %s135 = ssub.s32 %s17, %s24
      %p136 = scmp.eq.s32.totalorder %s135, 0
      %s138 = sadd.s32 %s137, 1
      %s139 = scalar_select %p136, %s137, %s138
      %p142 = pneg %p136
      %p143 = scmp.eq.s32.totalorder %s17, 1
      %p144 = por %p142, %p143
      %p145 = scmp.ne.s32.totalorder %s137, %s140
      %p146 = scmp.eq.s32.totalorder %s17, 0
      %p147 = por %p145, %p146
      %p148 = scmp.ne.s32.totalorder %s137, %s140
      %p149 = scmp.eq.s32.totalorder %s22, 1
      %p150 = por %p148, %p149
      %p151 = scmp.ne.s32.totalorder %s140, %s141
      %p152 = scmp.eq.s32.totalorder %s22, 0
      %p153 = por %p151, %p152
      %p154 = scmp.ne.s32.totalorder %s140, %s141
      %p155 = scmp.eq.s32.totalorder %s23, 1
      %p156 = por %p154, %p155
      %p158 = scmp.ne.s32.totalorder %s141, %s157
      %p159 = scmp.eq.s32.totalorder %s23, 0
      %p160 = por %p158, %p159
      %s161 = ssub.s32 %s17, %s24
      %p162 = scmp.eq.s32.totalorder %s161, 0
      %s164 = sadd.s32 %s163, 1
      %s165 = scalar_select %p162, %s163, %s164
      %p168 = pneg %p162
      %p169 = scmp.eq.s32.totalorder %s17, 1
      %p170 = por %p168, %p169
      %p171 = scmp.ne.s32.totalorder %s163, %s166
      %p172 = scmp.eq.s32.totalorder %s17, 0
      %p173 = por %p171, %p172
      %p174 = scmp.ne.s32.totalorder %s163, %s166
      %p175 = scmp.eq.s32.totalorder %s22, 1
      %p176 = por %p174, %p175
      %p177 = scmp.ne.s32.totalorder %s166, %s167
      %p178 = scmp.eq.s32.totalorder %s22, 0
      %p179 = por %p177, %p178
      %p180 = scmp.ne.s32.totalorder %s166, %s167
      %p181 = scmp.eq.s32.totalorder %s23, 1
      %p182 = por %p180, %p181
      %p184 = scmp.ne.s32.totalorder %s167, %s183
      %p185 = scmp.eq.s32.totalorder %s23, 0
      %p186 = por %p184, %p185
      %s188 = sadd.s32 %s187, 1
      %p191 = scmp.eq.s32.totalorder %s17, 1
      %p192 = scmp.ne.s32.totalorder %s187, %s189
      %p193 = scmp.eq.s32.totalorder %s17, 0
      %p194 = por %p192, %p193
      %p195 = scmp.ne.s32.totalorder %s187, %s189
      %p196 = scmp.eq.s32.totalorder %s22, 1
      %p197 = por %p195, %p196
      %p198 = scmp.ne.s32.totalorder %s189, %s190
      %p199 = scmp.eq.s32.totalorder %s22, 0
      %p200 = por %p198, %p199
      %p201 = scmp.ne.s32.totalorder %s189, %s190
      %p202 = scmp.eq.s32.totalorder %s23, 1
      %p203 = por %p201, %p202
      %p205 = scmp.ne.s32.totalorder %s190, %s204
      %p206 = scmp.eq.s32.totalorder %s23, 0
      %p207 = por %p205, %p206
      %p208 = scmp.le.s32.totalorder 1, %s17
      %p209 = scmp.lt.s32.totalorder %s17, 3
      %p210 = pnand %p208, %p209
      %p211 = pneg %p210
      // Predicated region
      $region9: #{noisy_topk_gating.1} parent=5 // pred_check
        _
      $region10: #{noisy_topk_gating.1} parent=5 // pred_check_branch
        %213 = sbr.rel (%p210) target = $region12
      $region11: #{noisy_topk_gating.1} parent=5 // pred_region
        %s214 = ssub.s32 %s17, 1
        // Predicated region
        $region13: #{noisy_topk_gating.1} parent=11 // pred_check
          %p215 = pneg %p64
        $region14: #{noisy_topk_gating.1} parent=11 // pred_check_branch
          %217 = sbr.rel (%p215) target = $region16
        $region15: #{noisy_topk_gating.1} parent=11 // pred_region
          _
        $region16: #{noisy_topk_gating.1} parent=11 // pred_fallthru
          _
        // Predicated region
        $region17: #{noisy_topk_gating.1} parent=11 // pred_check
          %p218 = pneg %p85
        $region18: #{noisy_topk_gating.1} parent=11 // pred_check_branch
          %220 = sbr.rel (%p218) target = $region20
        $region19: #{noisy_topk_gating.1} parent=11 // pred_region
          _
        $region20: #{noisy_topk_gating.1} parent=11 // pred_fallthru
          _
        // Predicated region
        $region21: #{noisy_topk_gating.1} parent=11 // pred_check
          %p221 = pneg %p106
        $region22: #{noisy_topk_gating.1} parent=11 // pred_check_branch
          %223 = sbr.rel (%p221) target = $region24
        $region23: #{noisy_topk_gating.1} parent=11 // pred_region
          _
        $region24: #{noisy_topk_gating.1} parent=11 // pred_fallthru
          _
        // Predicated region
        $region25: #{noisy_topk_gating.1} parent=11 // pred_check
          %p224 = pneg %p127
        $region26: #{noisy_topk_gating.1} parent=11 // pred_check_branch
          %226 = sbr.rel (%p224) target = $region28
        $region27: #{noisy_topk_gating.1} parent=11 // pred_region
          _
        $region28: #{noisy_topk_gating.1} parent=11 // pred_fallthru
          _
      $region12: #{noisy_topk_gating.1} parent=5 // pred_fallthru
        _
      %p227 = scmp.lt.s32.totalorder %s17, 2
      // Predicated region
      $region29: #{noisy_topk_gating.1} parent=5 // pred_check
        %p228 = pneg %p227
      $region30: #{noisy_topk_gating.1} parent=5 // pred_check_branch
        %230 = sbr.rel (%p228) target = $region32
      $region31: #{noisy_topk_gating.1} parent=5 // pred_region
        // Predicated region
        $region33: #{noisy_topk_gating.1} parent=31 // pred_check
          %p231 = pneg %p37
        $region34: #{noisy_topk_gating.1} parent=31 // pred_check_branch
          %233 = sbr.rel (%p231) target = $region36
        $region35: #{noisy_topk_gating.1} parent=31 // pred_region
          %p234 = scmp.lt.s32.totalorder %s17, 1
          %s235 = scalar_select %p234, %s17, 1
          %s236 = smul.addr %s235, 54
          %s237 = smul.addr %s236, 4
          %s238 = scalar_lea.vmem %s0, %s237
        $region36: #{noisy_topk_gating.1} parent=31 // pred_fallthru
          _
        // Predicated region
        $region37: #{noisy_topk_gating.1} parent=31 // pred_check
          %p239 = pneg %p147
        $region38: #{noisy_topk_gating.1} parent=31 // pred_check_branch
          %241 = sbr.rel (%p239) target = $region40
        $region39: #{noisy_topk_gating.1} parent=31 // pred_region
          %p242 = scmp.lt.s32.totalorder %s17, 1
          %s243 = scalar_select %p242, %s17, 1
          %s244 = scalar_lea.vmem %s5, %s243
        $region40: #{noisy_topk_gating.1} parent=31 // pred_fallthru
          _
      $region32: #{noisy_topk_gating.1} parent=5 // pred_fallthru
        _
      %p245 = scmp.le.s32.totalorder 1, %s17
      %p246 = scmp.lt.s32.totalorder %s17, 3
      %p247 = pnand %p245, %p246
      %p248 = pneg %p247
      // Predicated region
      $region41: #{noisy_topk_gating.1} parent=5 // pred_check
        _
      $region42: #{noisy_topk_gating.1} parent=5 // pred_check_branch
        %250 = sbr.rel (%p247) target = $region44
      $region43: #{noisy_topk_gating.1} parent=5 // pred_region
        %s251 = ssub.s32 %s17, 1
        %p252 = scmp.lt.s32.totalorder %s22, 1
        %s253 = scalar_select %p252, %s22, 1
        %s254 = smul.addr %s253, 54
        %s255 = smul.addr %s254, 4
        %s256 = scalar_lea.vmem %s0, %s255
        %p257 = pneg %p43
        %p258 = pneg %p40
        %p259 = pneg %p64
        %p260 = pneg %p61
        %p261 = pneg %p85
        %p262 = pneg %p82
        %p263 = pneg %p106
        %p264 = pneg %p103
        %p265 = pneg %p127
        %p266 = pneg %p124
        %p267 = scmp.lt.s32.totalorder %s22, 1
        %s268 = scalar_select %p267, %s22, 1
        %s269 = scalar_lea.vmem %s5, %s268
        %p270 = pneg %p153
        %p271 = pneg %p150
        %p272 = pneg %p179
        %p273 = pneg %p176
        %s274 = sand.u32 %s166, 1
        %s275 = scalar_lea.sflag [#allocation4], %s274
        %s276 = sand.u32 %s166, 1
        %s277 = scalar_lea.vmem [#allocation3], %s276
        %p278 = pneg %p200
        %p279 = pneg %p197
        %p280 = scmp.lt.s32.totalorder %s22, 1
        %s281 = scalar_select %p280, %s22, 1
        %s282 = smul.addr %s281, 54
        %s283 = smul.addr %s282, 4
        %s284 = scalar_lea.vmem %s0, %s283
        %p285 = scmp.lt.s32.totalorder %s22, 1
        %s286 = scalar_select %p285, %s22, 1
        %s287 = scalar_lea.vmem %s5, %s286
        %p289 = scmp.eq.s32.totalorder %s22, 0
        // Predicated region
        $region45: #{noisy_topk_gating.1} parent=43 // pred_check
          %p290 = pneg %p289
        $region46: #{noisy_topk_gating.1} parent=43 // pred_check_branch
          %292 = sbr.rel (%p290) target = $region48
        $region47: #{noisy_topk_gating.1} parent=43 // pred_region
          %293 = vst [vmem:[#allocation2] sm:$0xff] 0
          %294 = vst [vmem:[#allocation2 + $0x8] sm:$0xff] 0
          %295 = vst [vmem:[#allocation2 + $0x10] sm:$0xff] 0
          %296 = vst [vmem:[#allocation2 + $0x18] sm:$0xff] 0
          %297 = vst [vmem:[#allocation2 + $0x20] sm:$0xff] 0
          %298 = vst [vmem:[#allocation2 + $0x28] sm:$0xff] 0
          %299 = vst [vmem:[#allocation2 + $0x30] sm:$0xff] 0
          %300 = vst [vmem:[#allocation2 + $0x38] sm:$0xff] 0
          %301 = vst [vmem:[#allocation2 + $0x40] sm:$0xff] 0
          %302 = vst [vmem:[#allocation2 + $0x48] sm:$0xff] 0
          %303 = vst [vmem:[#allocation2 + $0x50] sm:$0xff] 0
          %304 = vst [vmem:[#allocation2 + $0x58] sm:$0xff] 0
          %305 = vst [vmem:[#allocation2 + $0x60] sm:$0xff] 0
          %306 = vst [vmem:[#allocation2 + $0x68] sm:$0xff] 0
          %307 = vst [vmem:[#allocation2 + $0x70] sm:$0xff] 0
          %308 = vst [vmem:[#allocation2 + $0x78] sm:$0xff] 0
          %309 = vst [vmem:[%s7] sm:$0x1] 0.0
        $region48: #{noisy_topk_gating.1} parent=43 // pred_fallthru
          _
        %v310 = vld [vmem:[%s284] sm:$0xf]
        %v311 = vld [vmem:[%s284 + $0x4] sm:$0xf]
        %v312 = vld [vmem:[%s284 + $0x8] sm:$0x1]
        %v313 = vld [vmem:[%s284 + $0xc] sm:$0xf]
        %v314 = vld [vmem:[%s284 + $0x10] sm:$0xf]
        %v315 = vld [vmem:[%s284 + $0x14] sm:$0x1]
        %v316 = vld [vmem:[%s284 + $0x18] sm:$0xf]
        %v317 = vld [vmem:[%s284 + $0x1c] sm:$0xf]
        %v318 = vld [vmem:[%s284 + $0x20] sm:$0x1]
        %v319 = vld [vmem:[%s284 + $0x24] sm:$0xf]
        %v320 = vld [vmem:[%s284 + $0x28] sm:$0xf]
        %v321 = vld [vmem:[%s284 + $0x2c] sm:$0x1]
        %v322 = vld [vmem:[%s284 + $0x30] sm:$0xf]
        %v323 = vld [vmem:[%s284 + $0x34] sm:$0xf]
        %v324 = vld [vmem:[%s284 + $0x38] sm:$0x1]
        %v325 = vld [vmem:[%s284 + $0x3c] sm:$0xf]
        %v326 = vld [vmem:[%s284 + $0x40] sm:$0xf]
        %v327 = vld [vmem:[%s284 + $0x44] sm:$0x1]
        %v328 = vld [vmem:[%s284 + $0x48] sm:$0xf]
        %v329 = vld [vmem:[%s284 + $0x4c] sm:$0xf]
        %v330 = vld [vmem:[%s284 + $0x50] sm:$0x1]
        %v331 = vld [vmem:[%s284 + $0x54] sm:$0xf]
        %v332 = vld [vmem:[%s284 + $0x58] sm:$0xf]
        %v333 = vld [vmem:[%s284 + $0x5c] sm:$0x1]
        %v334 = vld [vmem:[%s284 + $0x60] sm:$0xf]
        %v335 = vld [vmem:[%s284 + $0x64] sm:$0xf]
        %v336 = vld [vmem:[%s284 + $0x68] sm:$0x1]
        %v337 = vld [vmem:[%s284 + $0x6c] sm:$0xf]
        %v338 = vld [vmem:[%s284 + $0x70] sm:$0xf]
        %v339 = vld [vmem:[%s284 + $0x74] sm:$0x1]
        %v340 = vld [vmem:[%s284 + $0x78] sm:$0xf]
        %v341 = vld [vmem:[%s284 + $0x7c] sm:$0xf]
        %v342 = vld [vmem:[%s284 + $0x80] sm:$0x1]
        %v343 = vld [vmem:[%s284 + $0x84] sm:$0xf]
        %v344 = vld [vmem:[%s284 + $0x88] sm:$0xf]
        %v345 = vld [vmem:[%s284 + $0x8c] sm:$0x1]
        %v346 = vld [vmem:[%s284 + $0x90] sm:$0xf]
        %v347 = vld [vmem:[%s284 + $0x94] sm:$0xf]
        %v348 = vld [vmem:[%s284 + $0x98] sm:$0x1]
        %v349 = vld [vmem:[%s284 + $0x9c] sm:$0xf]
        %v350 = vld [vmem:[%s284 + $0xa0] sm:$0xf]
        %v351 = vld [vmem:[%s284 + $0xa4] sm:$0x1]
        %v352 = vld [vmem:[%s284 + $0xa8] sm:$0xf]
        %v353 = vld [vmem:[%s284 + $0xac] sm:$0xf]
        %v354 = vld [vmem:[%s284 + $0xb0] sm:$0x1]
        %v355 = vld [vmem:[%s284 + $0xb4] sm:$0xf]
        %v356 = vld [vmem:[%s284 + $0xb8] sm:$0xf]
        %v357 = vld [vmem:[%s284 + $0xbc] sm:$0x1]
        %v358 = vld [vmem:[%s284 + $0xc0] sm:$0xf]
        %v359 = vld [vmem:[%s284 + $0xc4] sm:$0xf]
        %v360 = vld [vmem:[%s284 + $0xc8] sm:$0x1]
        %v361 = vld [vmem:[%s284 + $0xcc] sm:$0xf]
        %v362 = vld [vmem:[%s284 + $0xd0] sm:$0xf]
        %v363 = vld [vmem:[%s284 + $0xd4] sm:$0x1]
        %v396 = vunpack.c.l.b16 %v310
        %v397 = vunpack.c.l.b16 %v311
        %v398 = vunpack.c.l.b16 %v313
        %v399 = vunpack.c.l.b16 %v314
        %v400 = vunpack.c.l.b16 %v316
        %v401 = vunpack.c.l.b16 %v317
        %v402 = vunpack.c.l.b16 %v319
        %v403 = vunpack.c.l.b16 %v320
        %v404 = vunpack.c.l.b16 %v322
        %v405 = vunpack.c.l.b16 %v323
        %v406 = vunpack.c.l.b16 %v325
        %v407 = vunpack.c.l.b16 %v326
        %v408 = vunpack.c.l.b16 %v328
        %v409 = vunpack.c.l.b16 %v329
        %v410 = vunpack.c.l.b16 %v331
        %v411 = vunpack.c.l.b16 %v332
        %v412 = vunpack.c.l.b16 %v334
        %v413 = vunpack.c.l.b16 %v335
        %v414 = vunpack.c.l.b16 %v337
        %v415 = vunpack.c.l.b16 %v338
        %v416 = vunpack.c.l.b16 %v340
        %v417 = vunpack.c.l.b16 %v341
        %v418 = vunpack.c.l.b16 %v343
        %v419 = vunpack.c.l.b16 %v344
        %v420 = vunpack.c.l.b16 %v346
        %v421 = vunpack.c.l.b16 %v347
        %v422 = vunpack.c.l.b16 %v349
        %v423 = vunpack.c.l.b16 %v350
        %v424 = vunpack.c.l.b16 %v352
        %v425 = vunpack.c.l.b16 %v353
        %v426 = vunpack.c.l.b16 %v355
        %v427 = vunpack.c.l.b16 %v356
        %v428 = vpack.c.b16 %v397, %v396
        %v429 = vpack.c.b16 %v399, %v398
        %v430 = vpack.c.b16 %v401, %v400
        %v431 = vpack.c.b16 %v403, %v402
        %v432 = vpack.c.b16 %v405, %v404
        %v433 = vpack.c.b16 %v407, %v406
        %v434 = vpack.c.b16 %v409, %v408
        %v435 = vpack.c.b16 %v411, %v410
        %v436 = vpack.c.b16 %v413, %v412
        %v437 = vpack.c.b16 %v415, %v414
        %v438 = vpack.c.b16 %v417, %v416
        %v439 = vpack.c.b16 %v419, %v418
        %v440 = vpack.c.b16 %v421, %v420
        %v441 = vpack.c.b16 %v423, %v422
        %v442 = vpack.c.b16 %v425, %v424
        %v443 = vpack.c.b16 %v427, %v426
        %vm460 = vcmask 31744
        %461 = vst.msk [vmem:[#allocation2] sm:$0xff] %vm460, %v428
        %462 = vst.msk [vmem:[#allocation2 + $0x8] sm:$0xff] %vm460, %v429
        %463 = vst.msk [vmem:[#allocation2 + $0x10] sm:$0xff] %vm460, %v430
        %464 = vst.msk [vmem:[#allocation2 + $0x18] sm:$0xff] %vm460, %v431
        %465 = vst.msk [vmem:[#allocation2 + $0x20] sm:$0xff] %vm460, %v432
        %466 = vst.msk [vmem:[#allocation2 + $0x28] sm:$0xff] %vm460, %v433
        %467 = vst.msk [vmem:[#allocation2 + $0x30] sm:$0xff] %vm460, %v434
        %468 = vst.msk [vmem:[#allocation2 + $0x38] sm:$0xff] %vm460, %v435
        %469 = vst.msk [vmem:[#allocation2 + $0x40] sm:$0xff] %vm460, %v436
        %470 = vst.msk [vmem:[#allocation2 + $0x48] sm:$0xff] %vm460, %v437
        %471 = vst.msk [vmem:[#allocation2 + $0x50] sm:$0xff] %vm460, %v438
        %472 = vst.msk [vmem:[#allocation2 + $0x58] sm:$0xff] %vm460, %v439
        %473 = vst.msk [vmem:[#allocation2 + $0x60] sm:$0xff] %vm460, %v440
        %474 = vst.msk [vmem:[#allocation2 + $0x68] sm:$0xff] %vm460, %v441
        %475 = vst.msk [vmem:[#allocation2 + $0x70] sm:$0xff] %vm460, %v442
        %476 = vst.msk [vmem:[#allocation2 + $0x78] sm:$0xff] %vm460, %v443
        %v493 = vunpack.c.l.b16 %v312
        %v494 = vunpack.c.l.b16 %v315
        %v495 = vunpack.c.l.b16 %v318
        %v496 = vunpack.c.l.b16 %v321
        %v497 = vunpack.c.l.b16 %v324
        %v498 = vunpack.c.l.b16 %v327
        %v499 = vunpack.c.l.b16 %v330
        %v500 = vunpack.c.l.b16 %v333
        %v501 = vunpack.c.l.b16 %v336
        %v502 = vunpack.c.l.b16 %v339
        %v503 = vunpack.c.l.b16 %v342
        %v504 = vunpack.c.l.b16 %v345
        %v505 = vunpack.c.l.b16 %v348
        %v506 = vunpack.c.l.b16 %v351
        %v507 = vunpack.c.l.b16 %v354
        %v508 = vunpack.c.l.b16 %v357
        %v509 = vpack.c.b16 %v493, %v493
        %v510 = vpack.c.b16 %v494, %v494
        %v511 = vpack.c.b16 %v495, %v495
        %v512 = vpack.c.b16 %v496, %v496
        %v513 = vpack.c.b16 %v497, %v497
        %v514 = vpack.c.b16 %v498, %v498
        %v515 = vpack.c.b16 %v499, %v499
        %v516 = vpack.c.b16 %v500, %v500
        %v517 = vpack.c.b16 %v501, %v501
        %v518 = vpack.c.b16 %v502, %v502
        %v519 = vpack.c.b16 %v503, %v503
        %v520 = vpack.c.b16 %v504, %v504
        %v521 = vpack.c.b16 %v505, %v505
        %v522 = vpack.c.b16 %v506, %v506
        %v523 = vpack.c.b16 %v507, %v507
        %v524 = vpack.c.b16 %v508, %v508
        %vm525 = vsmask.f32 7424
        %v527 = vshrl.u32 %v428, 16
        %v529 = vshll.u32 %v428, 16
        %v531 = vrot.slane %v529, 1
        %v532 = vor.u32 %v527, %v531
        %v534 = vshll.u32 %v509, 16
        %v536 = vrot.slane %v534, 1
        %v537 = vsel %vm525, %v532, %v536
        %v539 = vshrl.u32 %v429, 16
        %v541 = vshll.u32 %v429, 16
        %v543 = vrot.slane %v541, 1
        %v544 = vor.u32 %v539, %v543
        %v546 = vshll.u32 %v510, 16
        %v548 = vrot.slane %v546, 1
        %v549 = vsel %vm525, %v544, %v548
        %v551 = vshrl.u32 %v430, 16
        %v553 = vshll.u32 %v430, 16
        %v555 = vrot.slane %v553, 1
        %v556 = vor.u32 %v551, %v555
        %v558 = vshll.u32 %v511, 16
        %v560 = vrot.slane %v558, 1
        %v561 = vsel %vm525, %v556, %v560
        %v563 = vshrl.u32 %v431, 16
        %v565 = vshll.u32 %v431, 16
        %v567 = vrot.slane %v565, 1
        %v568 = vor.u32 %v563, %v567
        %v570 = vshll.u32 %v512, 16
        %v572 = vrot.slane %v570, 1
        %v573 = vsel %vm525, %v568, %v572
        %v575 = vshrl.u32 %v432, 16
        %v577 = vshll.u32 %v432, 16
        %v579 = vrot.slane %v577, 1
        %v580 = vor.u32 %v575, %v579
        %v582 = vshll.u32 %v513, 16
        %v584 = vrot.slane %v582, 1
        %v585 = vsel %vm525, %v580, %v584
        %v587 = vshrl.u32 %v433, 16
        %v589 = vshll.u32 %v433, 16
        %v591 = vrot.slane %v589, 1
        %v592 = vor.u32 %v587, %v591
        %v594 = vshll.u32 %v514, 16
        %v596 = vrot.slane %v594, 1
        %v597 = vsel %vm525, %v592, %v596
        %v599 = vshrl.u32 %v434, 16
        %v601 = vshll.u32 %v434, 16
        %v603 = vrot.slane %v601, 1
        %v604 = vor.u32 %v599, %v603
        %v606 = vshll.u32 %v515, 16
        %v608 = vrot.slane %v606, 1
        %v609 = vsel %vm525, %v604, %v608
        %v611 = vshrl.u32 %v435, 16
        %v613 = vshll.u32 %v435, 16
        %v615 = vrot.slane %v613, 1
        %v616 = vor.u32 %v611, %v615
        %v618 = vshll.u32 %v516, 16
        %v620 = vrot.slane %v618, 1
        %v621 = vsel %vm525, %v616, %v620
        %v623 = vshrl.u32 %v436, 16
        %v625 = vshll.u32 %v436, 16
        %v627 = vrot.slane %v625, 1
        %v628 = vor.u32 %v623, %v627
        %v630 = vshll.u32 %v517, 16
        %v632 = vrot.slane %v630, 1
        %v633 = vsel %vm525, %v628, %v632
        %v635 = vshrl.u32 %v437, 16
        %v637 = vshll.u32 %v437, 16
        %v639 = vrot.slane %v637, 1
        %v640 = vor.u32 %v635, %v639
        %v642 = vshll.u32 %v518, 16
        %v644 = vrot.slane %v642, 1
        %v645 = vsel %vm525, %v640, %v644
        %v647 = vshrl.u32 %v438, 16
        %v649 = vshll.u32 %v438, 16
        %v651 = vrot.slane %v649, 1
        %v652 = vor.u32 %v647, %v651
        %v654 = vshll.u32 %v519, 16
        %v656 = vrot.slane %v654, 1
        %v657 = vsel %vm525, %v652, %v656
        %v659 = vshrl.u32 %v439, 16
        %v661 = vshll.u32 %v439, 16
        %v663 = vrot.slane %v661, 1
        %v664 = vor.u32 %v659, %v663
        %v666 = vshll.u32 %v520, 16
        %v668 = vrot.slane %v666, 1
        %v669 = vsel %vm525, %v664, %v668
        %v671 = vshrl.u32 %v440, 16
        %v673 = vshll.u32 %v440, 16
        %v675 = vrot.slane %v673, 1
        %v676 = vor.u32 %v671, %v675
        %v678 = vshll.u32 %v521, 16
        %v680 = vrot.slane %v678, 1
        %v681 = vsel %vm525, %v676, %v680
        %v683 = vshrl.u32 %v441, 16
        %v685 = vshll.u32 %v441, 16
        %v687 = vrot.slane %v685, 1
        %v688 = vor.u32 %v683, %v687
        %v690 = vshll.u32 %v522, 16
        %v692 = vrot.slane %v690, 1
        %v693 = vsel %vm525, %v688, %v692
        %v695 = vshrl.u32 %v442, 16
        %v697 = vshll.u32 %v442, 16
        %v699 = vrot.slane %v697, 1
        %v700 = vor.u32 %v695, %v699
        %v702 = vshll.u32 %v523, 16
        %v704 = vrot.slane %v702, 1
        %v705 = vsel %vm525, %v700, %v704
        %v707 = vshrl.u32 %v443, 16
        %v709 = vshll.u32 %v443, 16
        %v711 = vrot.slane %v709, 1
        %v712 = vor.u32 %v707, %v711
        %v714 = vshll.u32 %v524, 16
        %v716 = vrot.slane %v714, 1
        %v717 = vsel %vm525, %v712, %v716
        %718 = vrot.lane.b32.xlu0 %v537, 4
        %v719 = vpop.permute.xlu0 %718
        %720 = vrot.lane.b32.xlu0 %v549, 4
        %v721 = vpop.permute.xlu0 %720
        %722 = vrot.lane.b32.xlu0 %v561, 4
        %v723 = vpop.permute.xlu0 %722
        %724 = vrot.lane.b32.xlu0 %v573, 4
        %v725 = vpop.permute.xlu0 %724
        %726 = vrot.lane.b32.xlu0 %v585, 4
        %v727 = vpop.permute.xlu0 %726
        %728 = vrot.lane.b32.xlu0 %v597, 4
        %v729 = vpop.permute.xlu0 %728
        %730 = vrot.lane.b32.xlu0 %v609, 4
        %v731 = vpop.permute.xlu0 %730
        %732 = vrot.lane.b32.xlu0 %v621, 4
        %v733 = vpop.permute.xlu0 %732
        %734 = vrot.lane.b32.xlu0 %v633, 4
        %v735 = vpop.permute.xlu0 %734
        %736 = vrot.lane.b32.xlu0 %v645, 4
        %v737 = vpop.permute.xlu0 %736
        %738 = vrot.lane.b32.xlu0 %v657, 4
        %v739 = vpop.permute.xlu0 %738
        %740 = vrot.lane.b32.xlu0 %v669, 4
        %v741 = vpop.permute.xlu0 %740
        %742 = vrot.lane.b32.xlu0 %v681, 4
        %v743 = vpop.permute.xlu0 %742
        %744 = vrot.lane.b32.xlu0 %v693, 4
        %v745 = vpop.permute.xlu0 %744
        %746 = vrot.lane.b32.xlu0 %v705, 4
        %v747 = vpop.permute.xlu0 %746
        %748 = vrot.lane.b32.xlu0 %v717, 4
        %v749 = vpop.permute.xlu0 %748
        %vm766 = vcmask 64544
        %767 = vst.msk [vmem:[#allocation2] sm:$0xff] %vm766, %v719
        %768 = vst.msk [vmem:[#allocation2 + $0x8] sm:$0xff] %vm766, %v721
        %769 = vst.msk [vmem:[#allocation2 + $0x10] sm:$0xff] %vm766, %v723
        %770 = vst.msk [vmem:[#allocation2 + $0x18] sm:$0xff] %vm766, %v725
        %771 = vst.msk [vmem:[#allocation2 + $0x20] sm:$0xff] %vm766, %v727
        %772 = vst.msk [vmem:[#allocation2 + $0x28] sm:$0xff] %vm766, %v729
        %773 = vst.msk [vmem:[#allocation2 + $0x30] sm:$0xff] %vm766, %v731
        %774 = vst.msk [vmem:[#allocation2 + $0x38] sm:$0xff] %vm766, %v733
        %775 = vst.msk [vmem:[#allocation2 + $0x40] sm:$0xff] %vm766, %v735
        %776 = vst.msk [vmem:[#allocation2 + $0x48] sm:$0xff] %vm766, %v737
        %777 = vst.msk [vmem:[#allocation2 + $0x50] sm:$0xff] %vm766, %v739
        %778 = vst.msk [vmem:[#allocation2 + $0x58] sm:$0xff] %vm766, %v741
        %779 = vst.msk [vmem:[#allocation2 + $0x60] sm:$0xff] %vm766, %v743
        %780 = vst.msk [vmem:[#allocation2 + $0x68] sm:$0xff] %vm766, %v745
        %781 = vst.msk [vmem:[#allocation2 + $0x70] sm:$0xff] %vm766, %v747
        %782 = vst.msk [vmem:[#allocation2 + $0x78] sm:$0xff] %vm766, %v749
        %vm783 = vcmask 1046528
        %v784 = vrot.slane %v428, 1
        %v785 = vrot.slane %v509, 1
        %v786 = vsel %vm783, %v784, %v785
        %v787 = vrot.slane %v429, 1
        %v788 = vrot.slane %v510, 1
        %v789 = vsel %vm783, %v787, %v788
        %v790 = vrot.slane %v430, 1
        %v791 = vrot.slane %v511, 1
        %v792 = vsel %vm783, %v790, %v791
        %v793 = vrot.slane %v431, 1
        %v794 = vrot.slane %v512, 1
        %v795 = vsel %vm783, %v793, %v794
        %v796 = vrot.slane %v432, 1
        %v797 = vrot.slane %v513, 1
        %v798 = vsel %vm783, %v796, %v797
        %v799 = vrot.slane %v433, 1
        %v800 = vrot.slane %v514, 1
        %v801 = vsel %vm783, %v799, %v800
        %v802 = vrot.slane %v434, 1
        %v803 = vrot.slane %v515, 1
        %v804 = vsel %vm783, %v802, %v803
        %v805 = vrot.slane %v435, 1
        %v806 = vrot.slane %v516, 1
        %v807 = vsel %vm783, %v805, %v806
        %v808 = vrot.slane %v436, 1
        %v809 = vrot.slane %v517, 1
        %v810 = vsel %vm783, %v808, %v809
        %v811 = vrot.slane %v437, 1
        %v812 = vrot.slane %v518, 1
        %v813 = vsel %vm783, %v811, %v812
        %v814 = vrot.slane %v438, 1
        %v815 = vrot.slane %v519, 1
        %v816 = vsel %vm783, %v814, %v815
        %v817 = vrot.slane %v439, 1
        %v818 = vrot.slane %v520, 1
        %v819 = vsel %vm783, %v817, %v818
        %v820 = vrot.slane %v440, 1
        %v821 = vrot.slane %v521, 1
        %v822 = vsel %vm783, %v820, %v821
        %v823 = vrot.slane %v441, 1
        %v824 = vrot.slane %v522, 1
        %v825 = vsel %vm783, %v823, %v824
        %v826 = vrot.slane %v442, 1
        %v827 = vrot.slane %v523, 1
        %v828 = vsel %vm783, %v826, %v827
        %v829 = vrot.slane %v443, 1
        %v830 = vrot.slane %v524, 1
        %v831 = vsel %vm783, %v829, %v830
        %832 = vrot.lane.b32.xlu0 %v786, 8
        %v833 = vpop.permute.xlu0 %832
        %834 = vrot.lane.b32.xlu0 %v789, 8
        %v835 = vpop.permute.xlu0 %834
        %836 = vrot.lane.b32.xlu0 %v792, 8
        %v837 = vpop.permute.xlu0 %836
        %838 = vrot.lane.b32.xlu0 %v795, 8
        %v839 = vpop.permute.xlu0 %838
        %840 = vrot.lane.b32.xlu0 %v798, 8
        %v841 = vpop.permute.xlu0 %840
        %842 = vrot.lane.b32.xlu0 %v801, 8
        %v843 = vpop.permute.xlu0 %842
        %844 = vrot.lane.b32.xlu0 %v804, 8
        %v845 = vpop.permute.xlu0 %844
        %846 = vrot.lane.b32.xlu0 %v807, 8
        %v847 = vpop.permute.xlu0 %846
        %848 = vrot.lane.b32.xlu0 %v810, 8
        %v849 = vpop.permute.xlu0 %848
        %850 = vrot.lane.b32.xlu0 %v813, 8
        %v851 = vpop.permute.xlu0 %850
        %852 = vrot.lane.b32.xlu0 %v816, 8
        %v853 = vpop.permute.xlu0 %852
        %854 = vrot.lane.b32.xlu0 %v819, 8
        %v855 = vpop.permute.xlu0 %854
        %856 = vrot.lane.b32.xlu0 %v822, 8
        %v857 = vpop.permute.xlu0 %856
        %858 = vrot.lane.b32.xlu0 %v825, 8
        %v859 = vpop.permute.xlu0 %858
        %860 = vrot.lane.b32.xlu0 %v828, 8
        %v861 = vpop.permute.xlu0 %860
        %862 = vrot.lane.b32.xlu0 %v831, 8
        %v863 = vpop.permute.xlu0 %862
        %vm880 = vcmask 97344
        %881 = vst.msk [vmem:[#allocation2] sm:$0xff] %vm880, %v833
        %882 = vst.msk [vmem:[#allocation2 + $0x8] sm:$0xff] %vm880, %v835
        %883 = vst.msk [vmem:[#allocation2 + $0x10] sm:$0xff] %vm880, %v837
        %884 = vst.msk [vmem:[#allocation2 + $0x18] sm:$0xff] %vm880, %v839
        %885 = vst.msk [vmem:[#allocation2 + $0x20] sm:$0xff] %vm880, %v841
        %886 = vst.msk [vmem:[#allocation2 + $0x28] sm:$0xff] %vm880, %v843
        %887 = vst.msk [vmem:[#allocation2 + $0x30] sm:$0xff] %vm880, %v845
        %888 = vst.msk [vmem:[#allocation2 + $0x38] sm:$0xff] %vm880, %v847
        %889 = vst.msk [vmem:[#allocation2 + $0x40] sm:$0xff] %vm880, %v849
        %890 = vst.msk [vmem:[#allocation2 + $0x48] sm:$0xff] %vm880, %v851
        %891 = vst.msk [vmem:[#allocation2 + $0x50] sm:$0xff] %vm880, %v853
        %892 = vst.msk [vmem:[#allocation2 + $0x58] sm:$0xff] %vm880, %v855
        %893 = vst.msk [vmem:[#allocation2 + $0x60] sm:$0xff] %vm880, %v857
        %894 = vst.msk [vmem:[#allocation2 + $0x68] sm:$0xff] %vm880, %v859
        %895 = vst.msk [vmem:[#allocation2 + $0x70] sm:$0xff] %vm880, %v861
        %896 = vst.msk [vmem:[#allocation2 + $0x78] sm:$0xff] %vm880, %v863
        %v899 = vunpack.c.l.b16 %v358
        %v900 = vunpack.c.l.b16 %v359
        %v901 = vpack.c.b16 %v900, %v899
        %902 = vrot.lane.b32.xlu0 %v429, 12
        %v903 = vpop.permute.xlu0 %902
        %904 = vrot.lane.b32.xlu0 %v430, 12
        %v905 = vpop.permute.xlu0 %904
        %906 = vrot.lane.b32.xlu0 %v431, 12
        %v907 = vpop.permute.xlu0 %906
        %908 = vrot.lane.b32.xlu0 %v432, 12
        %v909 = vpop.permute.xlu0 %908
        %910 = vrot.lane.b32.xlu0 %v433, 12
        %v911 = vpop.permute.xlu0 %910
        %912 = vrot.lane.b32.xlu0 %v434, 12
        %v913 = vpop.permute.xlu0 %912
        %914 = vrot.lane.b32.xlu0 %v435, 12
        %v915 = vpop.permute.xlu0 %914
        %916 = vrot.lane.b32.xlu0 %v436, 12
        %v917 = vpop.permute.xlu0 %916
        %918 = vrot.lane.b32.xlu0 %v437, 12
        %v919 = vpop.permute.xlu0 %918
        %920 = vrot.lane.b32.xlu0 %v438, 12
        %v921 = vpop.permute.xlu0 %920
        %922 = vrot.lane.b32.xlu0 %v439, 12
        %v923 = vpop.permute.xlu0 %922
        %924 = vrot.lane.b32.xlu0 %v440, 12
        %v925 = vpop.permute.xlu0 %924
        %926 = vrot.lane.b32.xlu0 %v441, 12
        %v927 = vpop.permute.xlu0 %926
        %928 = vrot.lane.b32.xlu0 %v442, 12
        %v929 = vpop.permute.xlu0 %928
        %930 = vrot.lane.b32.xlu0 %v443, 12
        %v931 = vpop.permute.xlu0 %930
        %932 = vrot.lane.b32.xlu0 %v901, 12
        %v933 = vpop.permute.xlu0 %932
        %vm950 = vcmask 130144
        %951 = vst.msk [vmem:[#allocation2] sm:$0xff] %vm950, %v903
        %952 = vst.msk [vmem:[#allocation2 + $0x8] sm:$0xff] %vm950, %v905
        %953 = vst.msk [vmem:[#allocation2 + $0x10] sm:$0xff] %vm950, %v907
        %954 = vst.msk [vmem:[#allocation2 + $0x18] sm:$0xff] %vm950, %v909
        %955 = vst.msk [vmem:[#allocation2 + $0x20] sm:$0xff] %vm950, %v911
        %956 = vst.msk [vmem:[#allocation2 + $0x28] sm:$0xff] %vm950, %v913
        %957 = vst.msk [vmem:[#allocation2 + $0x30] sm:$0xff] %vm950, %v915
        %958 = vst.msk [vmem:[#allocation2 + $0x38] sm:$0xff] %vm950, %v917
        %959 = vst.msk [vmem:[#allocation2 + $0x40] sm:$0xff] %vm950, %v919
        %960 = vst.msk [vmem:[#allocation2 + $0x48] sm:$0xff] %vm950, %v921
        %961 = vst.msk [vmem:[#allocation2 + $0x50] sm:$0xff] %vm950, %v923
        %962 = vst.msk [vmem:[#allocation2 + $0x58] sm:$0xff] %vm950, %v925
        %963 = vst.msk [vmem:[#allocation2 + $0x60] sm:$0xff] %vm950, %v927
        %964 = vst.msk [vmem:[#allocation2 + $0x68] sm:$0xff] %vm950, %v929
        %965 = vst.msk [vmem:[#allocation2 + $0x70] sm:$0xff] %vm950, %v931
        %966 = vst.msk [vmem:[#allocation2 + $0x78] sm:$0xff] %vm950, %v933
        %v968 = vunpack.c.l.b16 %v360
        %v969 = vpack.c.b16 %v968, %v968
        %v971 = vshrl.u32 %v901, 16
        %v973 = vshll.u32 %v901, 16
        %v975 = vrot.slane %v973, 1
        %v976 = vor.u32 %v971, %v975
        %v978 = vshll.u32 %v969, 16
        %v980 = vrot.slane %v978, 1
        %v981 = vsel %vm525, %v976, %v980
        %982 = vrot.lane.b32.xlu0 %v549, 16
        %v983 = vpop.permute.xlu0 %982
        %984 = vrot.lane.b32.xlu0 %v561, 16
        %v985 = vpop.permute.xlu0 %984
        %986 = vrot.lane.b32.xlu0 %v573, 16
        %v987 = vpop.permute.xlu0 %986
        %988 = vrot.lane.b32.xlu0 %v585, 16
        %v989 = vpop.permute.xlu0 %988
        %990 = vrot.lane.b32.xlu0 %v597, 16
        %v991 = vpop.permute.xlu0 %990
        %992 = vrot.lane.b32.xlu0 %v609, 16
        %v993 = vpop.permute.xlu0 %992
        %994 = vrot.lane.b32.xlu0 %v621, 16
        %v995 = vpop.permute.xlu0 %994
        %996 = vrot.lane.b32.xlu0 %v633, 16
        %v997 = vpop.permute.xlu0 %996
        %998 = vrot.lane.b32.xlu0 %v645, 16
        %v999 = vpop.permute.xlu0 %998
        %1000 = vrot.lane.b32.xlu0 %v657, 16
        %v1001 = vpop.permute.xlu0 %1000
        %1002 = vrot.lane.b32.xlu0 %v669, 16
        %v1003 = vpop.permute.xlu0 %1002
        %1004 = vrot.lane.b32.xlu0 %v681, 16
        %v1005 = vpop.permute.xlu0 %1004
        %1006 = vrot.lane.b32.xlu0 %v693, 16
        %v1007 = vpop.permute.xlu0 %1006
        %1008 = vrot.lane.b32.xlu0 %v705, 16
        %v1009 = vpop.permute.xlu0 %1008
        %1010 = vrot.lane.b32.xlu0 %v717, 16
        %v1011 = vpop.permute.xlu0 %1010
        %1012 = vrot.lane.b32.xlu0 %v981, 16
        %v1013 = vpop.permute.xlu0 %1012
        %vm1030 = vcmask 162944
        %1031 = vst.msk [vmem:[#allocation2] sm:$0xff] %vm1030, %v983
        %1032 = vst.msk [vmem:[#allocation2 + $0x8] sm:$0xff] %vm1030, %v985
        %1033 = vst.msk [vmem:[#allocation2 + $0x10] sm:$0xff] %vm1030, %v987
        %1034 = vst.msk [vmem:[#allocation2 + $0x18] sm:$0xff] %vm1030, %v989
        %1035 = vst.msk [vmem:[#allocation2 + $0x20] sm:$0xff] %vm1030, %v991
        %1036 = vst.msk [vmem:[#allocation2 + $0x28] sm:$0xff] %vm1030, %v993
        %1037 = vst.msk [vmem:[#allocation2 + $0x30] sm:$0xff] %vm1030, %v995
        %1038 = vst.msk [vmem:[#allocation2 + $0x38] sm:$0xff] %vm1030, %v997
        %1039 = vst.msk [vmem:[#allocation2 + $0x40] sm:$0xff] %vm1030, %v999
        %1040 = vst.msk [vmem:[#allocation2 + $0x48] sm:$0xff] %vm1030, %v1001
        %1041 = vst.msk [vmem:[#allocation2 + $0x50] sm:$0xff] %vm1030, %v1003
        %1042 = vst.msk [vmem:[#allocation2 + $0x58] sm:$0xff] %vm1030, %v1005
        %1043 = vst.msk [vmem:[#allocation2 + $0x60] sm:$0xff] %vm1030, %v1007
        %1044 = vst.msk [vmem:[#allocation2 + $0x68] sm:$0xff] %vm1030, %v1009
        %1045 = vst.msk [vmem:[#allocation2 + $0x70] sm:$0xff] %vm1030, %v1011
        %1046 = vst.msk [vmem:[#allocation2 + $0x78] sm:$0xff] %vm1030, %v1013
        %v1047 = vrot.slane %v901, 1
        %v1048 = vrot.slane %v969, 1
        %v1049 = vsel %vm783, %v1047, %v1048
        %1050 = vrot.lane.b32.xlu0 %v789, 20
        %v1051 = vpop.permute.xlu0 %1050
        %1052 = vrot.lane.b32.xlu0 %v792, 20
        %v1053 = vpop.permute.xlu0 %1052
        %1054 = vrot.lane.b32.xlu0 %v795, 20
        %v1055 = vpop.permute.xlu0 %1054
        %1056 = vrot.lane.b32.xlu0 %v798, 20
        %v1057 = vpop.permute.xlu0 %1056
        %1058 = vrot.lane.b32.xlu0 %v801, 20
        %v1059 = vpop.permute.xlu0 %1058
        %1060 = vrot.lane.b32.xlu0 %v804, 20
        %v1061 = vpop.permute.xlu0 %1060
        %1062 = vrot.lane.b32.xlu0 %v807, 20
        %v1063 = vpop.permute.xlu0 %1062
        %1064 = vrot.lane.b32.xlu0 %v810, 20
        %v1065 = vpop.permute.xlu0 %1064
        %1066 = vrot.lane.b32.xlu0 %v813, 20
        %v1067 = vpop.permute.xlu0 %1066
        %1068 = vrot.lane.b32.xlu0 %v816, 20
        %v1069 = vpop.permute.xlu0 %1068
        %1070 = vrot.lane.b32.xlu0 %v819, 20
        %v1071 = vpop.permute.xlu0 %1070
        %1072 = vrot.lane.b32.xlu0 %v822, 20
        %v1073 = vpop.permute.xlu0 %1072
        %1074 = vrot.lane.b32.xlu0 %v825, 20
        %v1075 = vpop.permute.xlu0 %1074
        %1076 = vrot.lane.b32.xlu0 %v828, 20
        %v1077 = vpop.permute.xlu0 %1076
        %1078 = vrot.lane.b32.xlu0 %v831, 20
        %v1079 = vpop.permute.xlu0 %1078
        %1080 = vrot.lane.b32.xlu0 %v1049, 20
        %v1081 = vpop.permute.xlu0 %1080
        %vm1098 = vcmask 195744
        %1099 = vst.msk [vmem:[#allocation2] sm:$0xff] %vm1098, %v1051
        %1100 = vst.msk [vmem:[#allocation2 + $0x8] sm:$0xff] %vm1098, %v1053
        %1101 = vst.msk [vmem:[#allocation2 + $0x10] sm:$0xff] %vm1098, %v1055
        %1102 = vst.msk [vmem:[#allocation2 + $0x18] sm:$0xff] %vm1098, %v1057
        %1103 = vst.msk [vmem:[#allocation2 + $0x20] sm:$0xff] %vm1098, %v1059
        %1104 = vst.msk [vmem:[#allocation2 + $0x28] sm:$0xff] %vm1098, %v1061
        %1105 = vst.msk [vmem:[#allocation2 + $0x30] sm:$0xff] %vm1098, %v1063
        %1106 = vst.msk [vmem:[#allocation2 + $0x38] sm:$0xff] %vm1098, %v1065
        %1107 = vst.msk [vmem:[#allocation2 + $0x40] sm:$0xff] %vm1098, %v1067
        %1108 = vst.msk [vmem:[#allocation2 + $0x48] sm:$0xff] %vm1098, %v1069
        %1109 = vst.msk [vmem:[#allocation2 + $0x50] sm:$0xff] %vm1098, %v1071
        %1110 = vst.msk [vmem:[#allocation2 + $0x58] sm:$0xff] %vm1098, %v1073
        %1111 = vst.msk [vmem:[#allocation2 + $0x60] sm:$0xff] %vm1098, %v1075
        %1112 = vst.msk [vmem:[#allocation2 + $0x68] sm:$0xff] %vm1098, %v1077
        %1113 = vst.msk [vmem:[#allocation2 + $0x70] sm:$0xff] %vm1098, %v1079
        %1114 = vst.msk [vmem:[#allocation2 + $0x78] sm:$0xff] %vm1098, %v1081
        %v1117 = vunpack.c.l.b16 %v361
        %v1118 = vunpack.c.l.b16 %v362
        %v1119 = vpack.c.b16 %v1118, %v1117
        %1120 = vrot.lane.b32.xlu0 %v430, 24
        %v1121 = vpop.permute.xlu0 %1120
        %1122 = vrot.lane.b32.xlu0 %v431, 24
        %v1123 = vpop.permute.xlu0 %1122
        %1124 = vrot.lane.b32.xlu0 %v432, 24
        %v1125 = vpop.permute.xlu0 %1124
        %1126 = vrot.lane.b32.xlu0 %v433, 24
        %v1127 = vpop.permute.xlu0 %1126
        %1128 = vrot.lane.b32.xlu0 %v434, 24
        %v1129 = vpop.permute.xlu0 %1128
        %1130 = vrot.lane.b32.xlu0 %v435, 24
        %v1131 = vpop.permute.xlu0 %1130
        %1132 = vrot.lane.b32.xlu0 %v436, 24
        %v1133 = vpop.permute.xlu0 %1132
        %1134 = vrot.lane.b32.xlu0 %v437, 24
        %v1135 = vpop.permute.xlu0 %1134
        %1136 = vrot.lane.b32.xlu0 %v438, 24
        %v1137 = vpop.permute.xlu0 %1136
        %1138 = vrot.lane.b32.xlu0 %v439, 24
        %v1139 = vpop.permute.xlu0 %1138
        %1140 = vrot.lane.b32.xlu0 %v440, 24
        %v1141 = vpop.permute.xlu0 %1140
        %1142 = vrot.lane.b32.xlu0 %v441, 24
        %v1143 = vpop.permute.xlu0 %1142
        %1144 = vrot.lane.b32.xlu0 %v442, 24
        %v1145 = vpop.permute.xlu0 %1144
        %1146 = vrot.lane.b32.xlu0 %v443, 24
        %v1147 = vpop.permute.xlu0 %1146
        %1148 = vrot.lane.b32.xlu0 %v901, 24
        %v1149 = vpop.permute.xlu0 %1148
        %1150 = vrot.lane.b32.xlu0 %v1119, 24
        %v1151 = vpop.permute.xlu0 %1150
        %vm1168 = vcmask 228544
        %1169 = vst.msk [vmem:[#allocation2] sm:$0xff] %vm1168, %v1121
        %1170 = vst.msk [vmem:[#allocation2 + $0x8] sm:$0xff] %vm1168, %v1123
        %1171 = vst.msk [vmem:[#allocation2 + $0x10] sm:$0xff] %vm1168, %v1125
        %1172 = vst.msk [vmem:[#allocation2 + $0x18] sm:$0xff] %vm1168, %v1127
        %1173 = vst.msk [vmem:[#allocation2 + $0x20] sm:$0xff] %vm1168, %v1129
        %1174 = vst.msk [vmem:[#allocation2 + $0x28] sm:$0xff] %vm1168, %v1131
        %1175 = vst.msk [vmem:[#allocation2 + $0x30] sm:$0xff] %vm1168, %v1133
        %1176 = vst.msk [vmem:[#allocation2 + $0x38] sm:$0xff] %vm1168, %v1135
        %1177 = vst.msk [vmem:[#allocation2 + $0x40] sm:$0xff] %vm1168, %v1137
        %1178 = vst.msk [vmem:[#allocation2 + $0x48] sm:$0xff] %vm1168, %v1139
        %1179 = vst.msk [vmem:[#allocation2 + $0x50] sm:$0xff] %vm1168, %v1141
        %1180 = vst.msk [vmem:[#allocation2 + $0x58] sm:$0xff] %vm1168, %v1143
        %1181 = vst.msk [vmem:[#allocation2 + $0x60] sm:$0xff] %vm1168, %v1145
        %1182 = vst.msk [vmem:[#allocation2 + $0x68] sm:$0xff] %vm1168, %v1147
        %1183 = vst.msk [vmem:[#allocation2 + $0x70] sm:$0xff] %vm1168, %v1149
        %1184 = vst.msk [vmem:[#allocation2 + $0x78] sm:$0xff] %vm1168, %v1151
        %v1186 = vunpack.c.l.b16 %v363
        %v1187 = vpack.c.b16 %v1186, %v1186
        %v1189 = vshrl.u32 %v1119, 16
        %v1191 = vshll.u32 %v1119, 16
        %v1193 = vrot.slane %v1191, 1
        %v1194 = vor.u32 %v1189, %v1193
        %v1196 = vshll.u32 %v1187, 16
        %v1198 = vrot.slane %v1196, 1
        %v1199 = vsel %vm525, %v1194, %v1198
        %1200 = vrot.lane.b32.xlu0 %v561, 28
        %v1201 = vpop.permute.xlu0 %1200
        %1202 = vrot.lane.b32.xlu0 %v573, 28
        %v1203 = vpop.permute.xlu0 %1202
        %1204 = vrot.lane.b32.xlu0 %v585, 28
        %v1205 = vpop.permute.xlu0 %1204
        %1206 = vrot.lane.b32.xlu0 %v597, 28
        %v1207 = vpop.permute.xlu0 %1206
        %1208 = vrot.lane.b32.xlu0 %v609, 28
        %v1209 = vpop.permute.xlu0 %1208
        %1210 = vrot.lane.b32.xlu0 %v621, 28
        %v1211 = vpop.permute.xlu0 %1210
        %1212 = vrot.lane.b32.xlu0 %v633, 28
        %v1213 = vpop.permute.xlu0 %1212
        %1214 = vrot.lane.b32.xlu0 %v645, 28
        %v1215 = vpop.permute.xlu0 %1214
        %1216 = vrot.lane.b32.xlu0 %v657, 28
        %v1217 = vpop.permute.xlu0 %1216
        %1218 = vrot.lane.b32.xlu0 %v669, 28
        %v1219 = vpop.permute.xlu0 %1218
        %1220 = vrot.lane.b32.xlu0 %v681, 28
        %v1221 = vpop.permute.xlu0 %1220
        %1222 = vrot.lane.b32.xlu0 %v693, 28
        %v1223 = vpop.permute.xlu0 %1222
        %1224 = vrot.lane.b32.xlu0 %v705, 28
        %v1225 = vpop.permute.xlu0 %1224
        %1226 = vrot.lane.b32.xlu0 %v717, 28
        %v1227 = vpop.permute.xlu0 %1226
        %1228 = vrot.lane.b32.xlu0 %v981, 28
        %v1229 = vpop.permute.xlu0 %1228
        %1230 = vrot.lane.b32.xlu0 %v1199, 28
        %v1231 = vpop.permute.xlu0 %1230
        %vm1248 = vcmask 261344
        %1249 = vst.msk [vmem:[#allocation2] sm:$0xff] %vm1248, %v1201
        %1250 = vst.msk [vmem:[#allocation2 + $0x8] sm:$0xff] %vm1248, %v1203
        %1251 = vst.msk [vmem:[#allocation2 + $0x10] sm:$0xff] %vm1248, %v1205
        %1252 = vst.msk [vmem:[#allocation2 + $0x18] sm:$0xff] %vm1248, %v1207
        %1253 = vst.msk [vmem:[#allocation2 + $0x20] sm:$0xff] %vm1248, %v1209
        %1254 = vst.msk [vmem:[#allocation2 + $0x28] sm:$0xff] %vm1248, %v1211
        %1255 = vst.msk [vmem:[#allocation2 + $0x30] sm:$0xff] %vm1248, %v1213
        %1256 = vst.msk [vmem:[#allocation2 + $0x38] sm:$0xff] %vm1248, %v1215
        %1257 = vst.msk [vmem:[#allocation2 + $0x40] sm:$0xff] %vm1248, %v1217
        %1258 = vst.msk [vmem:[#allocation2 + $0x48] sm:$0xff] %vm1248, %v1219
        %1259 = vst.msk [vmem:[#allocation2 + $0x50] sm:$0xff] %vm1248, %v1221
        %1260 = vst.msk [vmem:[#allocation2 + $0x58] sm:$0xff] %vm1248, %v1223
        %1261 = vst.msk [vmem:[#allocation2 + $0x60] sm:$0xff] %vm1248, %v1225
        %1262 = vst.msk [vmem:[#allocation2 + $0x68] sm:$0xff] %vm1248, %v1227
        %1263 = vst.msk [vmem:[#allocation2 + $0x70] sm:$0xff] %vm1248, %v1229
        %1264 = vst.msk [vmem:[#allocation2 + $0x78] sm:$0xff] %vm1248, %v1231
        %v1265 = vrot.slane %v1119, 1
        %v1266 = vrot.slane %v1187, 1
        %v1267 = vsel %vm783, %v1265, %v1266
        %1268 = vrot.lane.b32.xlu0 %v792, 32
        %v1269 = vpop.permute.xlu0 %1268
        %1270 = vrot.lane.b32.xlu0 %v795, 32
        %v1271 = vpop.permute.xlu0 %1270
        %1272 = vrot.lane.b32.xlu0 %v798, 32
        %v1273 = vpop.permute.xlu0 %1272
        %1274 = vrot.lane.b32.xlu0 %v801, 32
        %v1275 = vpop.permute.xlu0 %1274
        %1276 = vrot.lane.b32.xlu0 %v804, 32
        %v1277 = vpop.permute.xlu0 %1276
        %1278 = vrot.lane.b32.xlu0 %v807, 32
        %v1279 = vpop.permute.xlu0 %1278
        %1280 = vrot.lane.b32.xlu0 %v810, 32
        %v1281 = vpop.permute.xlu0 %1280
        %1282 = vrot.lane.b32.xlu0 %v813, 32
        %v1283 = vpop.permute.xlu0 %1282
        %1284 = vrot.lane.b32.xlu0 %v816, 32
        %v1285 = vpop.permute.xlu0 %1284
        %1286 = vrot.lane.b32.xlu0 %v819, 32
        %v1287 = vpop.permute.xlu0 %1286
        %1288 = vrot.lane.b32.xlu0 %v822, 32
        %v1289 = vpop.permute.xlu0 %1288
        %1290 = vrot.lane.b32.xlu0 %v825, 32
        %v1291 = vpop.permute.xlu0 %1290
        %1292 = vrot.lane.b32.xlu0 %v828, 32
        %v1293 = vpop.permute.xlu0 %1292
        %1294 = vrot.lane.b32.xlu0 %v831, 32
        %v1295 = vpop.permute.xlu0 %1294
        %1296 = vrot.lane.b32.xlu0 %v1049, 32
        %v1297 = vpop.permute.xlu0 %1296
        %1298 = vrot.lane.b32.xlu0 %v1267, 32
        %v1299 = vpop.permute.xlu0 %1298
        %vm1316 = vcmask 294144
        %1317 = vst.msk [vmem:[#allocation2] sm:$0xff] %vm1316, %v1269
        %1318 = vst.msk [vmem:[#allocation2 + $0x8] sm:$0xff] %vm1316, %v1271
        %1319 = vst.msk [vmem:[#allocation2 + $0x10] sm:$0xff] %vm1316, %v1273
        %1320 = vst.msk [vmem:[#allocation2 + $0x18] sm:$0xff] %vm1316, %v1275
        %1321 = vst.msk [vmem:[#allocation2 + $0x20] sm:$0xff] %vm1316, %v1277
        %1322 = vst.msk [vmem:[#allocation2 + $0x28] sm:$0xff] %vm1316, %v1279
        %1323 = vst.msk [vmem:[#allocation2 + $0x30] sm:$0xff] %vm1316, %v1281
        %1324 = vst.msk [vmem:[#allocation2 + $0x38] sm:$0xff] %vm1316, %v1283
        %1325 = vst.msk [vmem:[#allocation2 + $0x40] sm:$0xff] %vm1316, %v1285
        %1326 = vst.msk [vmem:[#allocation2 + $0x48] sm:$0xff] %vm1316, %v1287
        %1327 = vst.msk [vmem:[#allocation2 + $0x50] sm:$0xff] %vm1316, %v1289
        %1328 = vst.msk [vmem:[#allocation2 + $0x58] sm:$0xff] %vm1316, %v1291
        %1329 = vst.msk [vmem:[#allocation2 + $0x60] sm:$0xff] %vm1316, %v1293
        %1330 = vst.msk [vmem:[#allocation2 + $0x68] sm:$0xff] %vm1316, %v1295
        %1331 = vst.msk [vmem:[#allocation2 + $0x70] sm:$0xff] %vm1316, %v1297
        %1332 = vst.msk [vmem:[#allocation2 + $0x78] sm:$0xff] %vm1316, %v1299
        %v1333 = vld [vmem:[#allocation2] sm:$0xff]
        %v1334 = vld [vmem:[#allocation2 + $0x8] sm:$0xff]
        %v1335 = vld [vmem:[#allocation2 + $0x10] sm:$0xff]
        %v1336 = vld [vmem:[#allocation2 + $0x18] sm:$0xff]
        %v1337 = vld [vmem:[#allocation2 + $0x20] sm:$0xff]
        %v1338 = vld [vmem:[#allocation2 + $0x28] sm:$0xff]
        %v1339 = vld [vmem:[#allocation2 + $0x30] sm:$0xff]
        %v1340 = vld [vmem:[#allocation2 + $0x38] sm:$0xff]
        %v1341 = vld [vmem:[#allocation2 + $0x40] sm:$0xff]
        %v1342 = vld [vmem:[#allocation2 + $0x48] sm:$0xff]
        %v1343 = vld [vmem:[#allocation2 + $0x50] sm:$0xff]
        %v1344 = vld [vmem:[#allocation2 + $0x58] sm:$0xff]
        %v1345 = vld [vmem:[#allocation2 + $0x60] sm:$0xff]
        %v1346 = vld [vmem:[#allocation2 + $0x68] sm:$0xff]
        %v1347 = vld [vmem:[#allocation2 + $0x70] sm:$0xff]
        %v1348 = vld [vmem:[#allocation2 + $0x78] sm:$0xff]
        %v1349 = vld [vmem:[%s1] sm:$0xf]
        %v1350 = vld [vmem:[%s1 + $0x4] sm:$0xf]
        %v1351 = vld [vmem:[%s1 + $0x8] sm:$0xf]
        %v1352 = vld [vmem:[%s1 + $0xc] sm:$0xf]
        %v1353 = vld [vmem:[%s1 + $0x10] sm:$0xf]
        %v1354 = vld [vmem:[%s1 + $0x14] sm:$0xf]
        %v1355 = vld [vmem:[%s1 + $0x18] sm:$0xf]
        %v1356 = vld [vmem:[%s1 + $0x1c] sm:$0xf]
        %v1357 = vld [vmem:[%s1 + $0x20] sm:$0xf]
        %v1358 = vld [vmem:[%s1 + $0x24] sm:$0xf]
        %v1359 = vld [vmem:[%s1 + $0x28] sm:$0xf]
        %v1360 = vld [vmem:[%s1 + $0x2c] sm:$0xf]
        %v1361 = vld [vmem:[%s1 + $0x30] sm:$0xf]
        %v1362 = vld [vmem:[%s1 + $0x34] sm:$0xf]
        %v1363 = vld [vmem:[%s1 + $0x38] sm:$0xf]
        %v1364 = vld [vmem:[%s1 + $0x3c] sm:$0xf]
        %v1365 = vld [vmem:[%s2] sm:$0x1]
        %v1367 = vlaneseq
        %v1368 = vshrl.u32 %v1367, 7
        %v1369 = vsub.s32 0, %v1368
        %v1370 = vrot.slane %v1365, %v1369
        %v1388 = vunpack.c.l.b16 %v1349
        %v1389 = vunpack.c.l.b16 %v1350
        %v1390 = vunpack.c.l.b16 %v1351
        %v1391 = vunpack.c.l.b16 %v1352
        %v1392 = vunpack.c.l.b16 %v1353
        %v1393 = vunpack.c.l.b16 %v1354
        %v1394 = vunpack.c.l.b16 %v1355
        %v1395 = vunpack.c.l.b16 %v1356
        %v1396 = vunpack.c.l.b16 %v1357
        %v1397 = vunpack.c.l.b16 %v1358
        %v1398 = vunpack.c.l.b16 %v1359
        %v1399 = vunpack.c.l.b16 %v1360
        %v1400 = vunpack.c.l.b16 %v1361
        %v1401 = vunpack.c.l.b16 %v1362
        %v1402 = vunpack.c.l.b16 %v1363
        %v1403 = vunpack.c.l.b16 %v1364
        %v1404 = vpack.c.b16 %v1389, %v1388
        %v1405 = vpack.c.b16 %v1391, %v1390
        %v1406 = vpack.c.b16 %v1393, %v1392
        %v1407 = vpack.c.b16 %v1395, %v1394
        %v1408 = vpack.c.b16 %v1397, %v1396
        %v1409 = vpack.c.b16 %v1399, %v1398
        %v1410 = vpack.c.b16 %v1401, %v1400
        %v1411 = vpack.c.b16 %v1403, %v1402
        %1420 = vmatprep.subr.bf16.mxu0 0
        %1421 = vmatpush1.bf16.msra.mxu0 %v1404
        %1422 = vmatprep.subr.bf16.mxu0 0
        %1423 = vmatpush1.bf16.msra.mxu0 %v1405
        %1424 = vmatprep.subr.bf16.mxu0 0
        %1425 = vmatpush1.bf16.msra.mxu0 %v1406
        %1426 = vmatprep.subr.bf16.mxu0 0
        %1427 = vmatpush1.bf16.msra.mxu0 %v1407
        %1428 = vmatprep.subr.bf16.mxu0 0
        %1429 = vmatpush1.bf16.msra.mxu0 %v1408
        %1430 = vmatprep.subr.bf16.mxu0 0
        %1431 = vmatpush1.bf16.msra.mxu0 %v1409
        %1432 = vmatprep.subr.bf16.mxu0 0
        %1433 = vmatpush1.bf16.msra.mxu0 %v1410
        %1434 = vmatprep.subr.bf16.mxu0 0
        %1435 = vmatpush1.bf16.msra.mxu0 %v1411
        %1436 = vmatprep.subr.bf16.mxu0 0
        %1437 = vmatpush1.bf16.msra.mxu0 0
        %1438 = vmatprep.subr.bf16.mxu0 0
        %1439 = vmatpush1.bf16.msra.mxu0 0
        %1440 = vmatprep.subr.bf16.mxu0 0
        %1441 = vmatpush1.bf16.msra.mxu0 0
        %1442 = vmatprep.subr.bf16.mxu0 0
        %1443 = vmatpush1.bf16.msra.mxu0 0
        %1444 = vmatprep.subr.bf16.mxu0 0
        %1445 = vmatpush1.bf16.msra.mxu0 0
        %1446 = vmatprep.subr.bf16.mxu0 0
        %1447 = vmatpush1.bf16.msra.mxu0 0
        %1448 = vmatprep.subr.bf16.mxu0 0
        %1449 = vmatpush1.bf16.msra.mxu0 0
        %1450 = vmatprep.subr.bf16.mxu0 0
        %1451 = vmatpush1.bf16.msra.mxu0 0
        %1452 = vmatprep.mubr.bf16.mxu0 0
        %1453 = vmatmul.mubr.bf16.gmra.mrb[0].mxu0 %v1333
        %v1454 = vpop.f32.mrb[0].mxu0
        %v1455 = vadd.f32 %v1370, %v1454
        %v1456 = vpop.f32.mrb[0].mxu0
        %v1457 = vpop.f32.mrb[0].mxu0
        %v1458 = vadd.f32 %v1370, %v1457
        %v1459 = vpop.f32.mrb[0].mxu0
        %1460 = vmatprep.mubr.bf16.mxu0 0
        %1461 = vmatmul.mubr.bf16.gmra.mrb[0].mxu0 %v1334
        %v1462 = vpop.f32.mrb[0].mxu0
        %v1463 = vadd.f32 %v1370, %v1462
        %v1464 = vpop.f32.mrb[0].mxu0
        %v1465 = vpop.f32.mrb[0].mxu0
        %v1466 = vadd.f32 %v1370, %v1465
        %v1467 = vpop.f32.mrb[0].mxu0
        %1468 = vmatprep.mubr.bf16.mxu0 0
        %1469 = vmatmul.mubr.bf16.gmra.mrb[0].mxu0 %v1335
        %v1470 = vpop.f32.mrb[0].mxu0
        %v1471 = vadd.f32 %v1370, %v1470
        %v1472 = vpop.f32.mrb[0].mxu0
        %v1473 = vpop.f32.mrb[0].mxu0
        %v1474 = vadd.f32 %v1370, %v1473
        %v1475 = vpop.f32.mrb[0].mxu0
        %1476 = vmatprep.mubr.bf16.mxu0 0
        %1477 = vmatmul.mubr.bf16.gmra.mrb[0].mxu0 %v1336
        %v1478 = vpop.f32.mrb[0].mxu0
        %v1479 = vadd.f32 %v1370, %v1478
        %v1480 = vpop.f32.mrb[0].mxu0
        %v1481 = vpop.f32.mrb[0].mxu0
        %v1482 = vadd.f32 %v1370, %v1481
        %v1483 = vpop.f32.mrb[0].mxu0
        %1484 = vmatprep.mubr.bf16.mxu0 0
        %1485 = vmatmul.mubr.bf16.gmra.mrb[0].mxu0 %v1337
        %v1486 = vpop.f32.mrb[0].mxu0
        %v1487 = vadd.f32 %v1370, %v1486
        %v1488 = vpop.f32.mrb[0].mxu0
        %v1489 = vpop.f32.mrb[0].mxu0
        %v1490 = vadd.f32 %v1370, %v1489
        %v1491 = vpop.f32.mrb[0].mxu0
        %1492 = vmatprep.mubr.bf16.mxu0 0
        %1493 = vmatmul.mubr.bf16.gmra.mrb[0].mxu0 %v1338
        %v1494 = vpop.f32.mrb[0].mxu0
        %v1495 = vadd.f32 %v1370, %v1494
        %v1496 = vpop.f32.mrb[0].mxu0
        %v1497 = vpop.f32.mrb[0].mxu0
        %v1498 = vadd.f32 %v1370, %v1497
        %v1499 = vpop.f32.mrb[0].mxu0
        %1500 = vmatprep.mubr.bf16.mxu0 0
        %1501 = vmatmul.mubr.bf16.gmra.mrb[0].mxu0 %v1339
        %v1502 = vpop.f32.mrb[0].mxu0
        %v1503 = vadd.f32 %v1370, %v1502
        %v1504 = vpop.f32.mrb[0].mxu0
        %v1505 = vpop.f32.mrb[0].mxu0
        %v1506 = vadd.f32 %v1370, %v1505
        %v1507 = vpop.f32.mrb[0].mxu0
        %1508 = vmatprep.mubr.bf16.mxu0 0
        %1509 = vmatmul.mubr.bf16.gmra.mrb[0].mxu0 %v1340
        %v1510 = vpop.f32.mrb[0].mxu0
        %v1511 = vadd.f32 %v1370, %v1510
        %v1512 = vpop.f32.mrb[0].mxu0
        %v1513 = vpop.f32.mrb[0].mxu0
        %v1514 = vadd.f32 %v1370, %v1513
        %v1515 = vpop.f32.mrb[0].mxu0
        %1516 = vmatprep.mubr.bf16.mxu0 0
        %1517 = vmatmul.mubr.bf16.gmra.mrb[0].mxu0 %v1341
        %v1518 = vpop.f32.mrb[0].mxu0
        %v1519 = vadd.f32 %v1370, %v1518
        %v1520 = vpop.f32.mrb[0].mxu0
        %v1521 = vpop.f32.mrb[0].mxu0
        %v1522 = vadd.f32 %v1370, %v1521
        %v1523 = vpop.f32.mrb[0].mxu0
        %1524 = vmatprep.mubr.bf16.mxu0 0
        %1525 = vmatmul.mubr.bf16.gmra.mrb[0].mxu0 %v1342
        %v1526 = vpop.f32.mrb[0].mxu0
        %v1527 = vadd.f32 %v1370, %v1526
        %v1528 = vpop.f32.mrb[0].mxu0
        %v1529 = vpop.f32.mrb[0].mxu0
        %v1530 = vadd.f32 %v1370, %v1529
        %v1531 = vpop.f32.mrb[0].mxu0
        %1532 = vmatprep.mubr.bf16.mxu0 0
        %1533 = vmatmul.mubr.bf16.gmra.mrb[0].mxu0 %v1343
        %v1534 = vpop.f32.mrb[0].mxu0
        %v1535 = vadd.f32 %v1370, %v1534
        %v1536 = vpop.f32.mrb[0].mxu0
        %v1537 = vpop.f32.mrb[0].mxu0
        %v1538 = vadd.f32 %v1370, %v1537
        %v1539 = vpop.f32.mrb[0].mxu0
        %1540 = vmatprep.mubr.bf16.mxu0 0
        %1541 = vmatmul.mubr.bf16.gmra.mrb[0].mxu0 %v1344
        %v1542 = vpop.f32.mrb[0].mxu0
        %v1543 = vadd.f32 %v1370, %v1542
        %v1544 = vpop.f32.mrb[0].mxu0
        %v1545 = vpop.f32.mrb[0].mxu0
        %v1546 = vadd.f32 %v1370, %v1545
        %v1547 = vpop.f32.mrb[0].mxu0
        %1548 = vmatprep.mubr.bf16.mxu0 0
        %1549 = vmatmul.mubr.bf16.gmra.mrb[0].mxu0 %v1345
        %v1550 = vpop.f32.mrb[0].mxu0
        %v1551 = vadd.f32 %v1370, %v1550
        %v1552 = vpop.f32.mrb[0].mxu0
        %v1553 = vpop.f32.mrb[0].mxu0
        %v1554 = vadd.f32 %v1370, %v1553
        %v1555 = vpop.f32.mrb[0].mxu0
        %1556 = vmatprep.mubr.bf16.mxu0 0
        %1557 = vmatmul.mubr.bf16.gmra.mrb[0].mxu0 %v1346
        %v1558 = vpop.f32.mrb[0].mxu0
        %v1559 = vadd.f32 %v1370, %v1558
        %v1560 = vpop.f32.mrb[0].mxu0
        %v1561 = vpop.f32.mrb[0].mxu0
        %v1562 = vadd.f32 %v1370, %v1561
        %v1563 = vpop.f32.mrb[0].mxu0
        %1564 = vmatprep.mubr.bf16.mxu0 0
        %1565 = vmatmul.mubr.bf16.gmra.mrb[0].mxu0 %v1347
        %v1566 = vpop.f32.mrb[0].mxu0
        %v1567 = vadd.f32 %v1370, %v1566
        %v1568 = vpop.f32.mrb[0].mxu0
        %v1569 = vpop.f32.mrb[0].mxu0
        %v1570 = vadd.f32 %v1370, %v1569
        %v1571 = vpop.f32.mrb[0].mxu0
        %1572 = vmatprep.mubr.bf16.mxu0 0
        %1573 = vmatmul.mubr.bf16.gmra.mrb[0].mxu0 %v1348
        %v1574 = vpop.f32.mrb[0].mxu0
        %v1575 = vadd.f32 %v1370, %v1574
        %v1576 = vpop.f32.mrb[0].mxu0
        %v1577 = vpop.f32.mrb[0].mxu0
        %v1578 = vadd.f32 %v1370, %v1577
        %v1579 = vpop.f32.mrb[0].mxu0
        %1580 = vdwg.mxu0
        %v1581 = vmax.f32 %v1455, 0.0
        %v1582 = vmax.f32 %v1458, 0.0
        %v1583 = vmax.f32 %v1463, 0.0
        %v1584 = vmax.f32 %v1466, 0.0
        %v1585 = vmax.f32 %v1471, 0.0
        %v1586 = vmax.f32 %v1474, 0.0
        %v1587 = vmax.f32 %v1479, 0.0
        %v1588 = vmax.f32 %v1482, 0.0
        %v1589 = vmax.f32 %v1487, 0.0
        %v1590 = vmax.f32 %v1490, 0.0
        %v1591 = vmax.f32 %v1495, 0.0
        %v1592 = vmax.f32 %v1498, 0.0
        %v1593 = vmax.f32 %v1503, 0.0
        %v1594 = vmax.f32 %v1506, 0.0
        %v1595 = vmax.f32 %v1511, 0.0
        %v1596 = vmax.f32 %v1514, 0.0
        %v1597 = vmax.f32 %v1519, 0.0
        %v1598 = vmax.f32 %v1522, 0.0
        %v1599 = vmax.f32 %v1527, 0.0
        %v1600 = vmax.f32 %v1530, 0.0
        %v1601 = vmax.f32 %v1535, 0.0
        %v1602 = vmax.f32 %v1538, 0.0
        %v1603 = vmax.f32 %v1543, 0.0
        %v1604 = vmax.f32 %v1546, 0.0
        %v1605 = vmax.f32 %v1551, 0.0
        %v1606 = vmax.f32 %v1554, 0.0
        %v1607 = vmax.f32 %v1559, 0.0
        %v1608 = vmax.f32 %v1562, 0.0
        %v1609 = vmax.f32 %v1567, 0.0
        %v1610 = vmax.f32 %v1570, 0.0
        %v1611 = vmax.f32 %v1575, 0.0
        %v1612 = vmax.f32 %v1578, 0.0
        %v1613 = vadd.f32 %v1581, %v1582
        %v1614 = vadd.f32 %v1613, %v1583
        %v1615 = vadd.f32 %v1614, %v1584
        %v1616 = vadd.f32 %v1615, %v1585
        %v1617 = vadd.f32 %v1616, %v1586
        %v1618 = vadd.f32 %v1617, %v1587
        %v1619 = vadd.f32 %v1618, %v1588
        %v1620 = vadd.f32 %v1619, %v1589
        %v1621 = vadd.f32 %v1620, %v1590
        %v1622 = vadd.f32 %v1621, %v1591
        %v1623 = vadd.f32 %v1622, %v1592
        %v1624 = vadd.f32 %v1623, %v1593
        %v1625 = vadd.f32 %v1624, %v1594
        %v1626 = vadd.f32 %v1625, %v1595
        %v1627 = vadd.f32 %v1626, %v1596
        %v1628 = vadd.f32 %v1627, %v1597
        %v1629 = vadd.f32 %v1628, %v1598
        %v1630 = vadd.f32 %v1629, %v1599
        %v1631 = vadd.f32 %v1630, %v1600
        %v1632 = vadd.f32 %v1631, %v1601
        %v1633 = vadd.f32 %v1632, %v1602
        %v1634 = vadd.f32 %v1633, %v1603
        %v1635 = vadd.f32 %v1634, %v1604
        %v1636 = vadd.f32 %v1635, %v1605
        %v1637 = vadd.f32 %v1636, %v1606
        %v1638 = vadd.f32 %v1637, %v1607
        %v1639 = vadd.f32 %v1638, %v1608
        %v1640 = vadd.f32 %v1639, %v1609
        %v1641 = vadd.f32 %v1640, %v1610
        %v1642 = vadd.f32 %v1641, %v1611
        %v1643 = vadd.f32 %v1642, %v1612
        %v1644 = vrot.slane %v1643, 4
        %v1645 = vadd.f32 %v1643, %v1644
        %v1646 = vrot.slane %v1645, 2
        %v1647 = vadd.f32 %v1645, %v1646
        %v1648 = vrot.slane %v1647, 1
        %v1649 = vadd.f32 %v1647, %v1648
        %v1650 = vmul.f32 %v1649, 0.00390625
        %v1651 = vld [vmem:[%s3] sm:$0xff]
        %v1652 = vld [vmem:[%s3 + $0x8] sm:$0xff]
        %v1653 = vld [vmem:[%s3 + $0x10] sm:$0xff]
        %v1654 = vld [vmem:[%s3 + $0x18] sm:$0xff]
        %v1655 = vld [vmem:[%s3 + $0x20] sm:$0xff]
        %v1656 = vld [vmem:[%s3 + $0x28] sm:$0xff]
        %v1657 = vld [vmem:[%s3 + $0x30] sm:$0xff]
        %v1658 = vld [vmem:[%s3 + $0x38] sm:$0xff]
        %v1659 = vld [vmem:[%s3 + $0x40] sm:$0xff]
        %v1660 = vld [vmem:[%s3 + $0x48] sm:$0xff]
        %v1661 = vld [vmem:[%s3 + $0x50] sm:$0xff]
        %v1662 = vld [vmem:[%s3 + $0x58] sm:$0xff]
        %v1663 = vld [vmem:[%s3 + $0x60] sm:$0xff]
        %v1664 = vld [vmem:[%s3 + $0x68] sm:$0xff]
        %v1665 = vld [vmem:[%s3 + $0x70] sm:$0xff]
        %v1666 = vld [vmem:[%s3 + $0x78] sm:$0xff]
        %v1667 = vld [vmem:[%s4] sm:$0x1]
        %1668 = vmatprep.subr.mxu0 0.0
        %1669 = vmatpush1.msra.mxu0 %v1651
        %1670 = vmatprep.subr.mxu0 0.0
        %1671 = vmatpush1.msra.mxu0 %v1652
        %1672 = vmatprep.subr.mxu0 0.0
        %1673 = vmatpush1.msra.mxu0 %v1653
        %1674 = vmatprep.subr.mxu0 0.0
        %1675 = vmatpush1.msra.mxu0 %v1654
        %1676 = vmatprep.subr.mxu0 0.0
        %1677 = vmatpush1.msra.mxu0 %v1655
        %1678 = vmatprep.subr.mxu0 0.0
        %1679 = vmatpush1.msra.mxu0 %v1656
        %1680 = vmatprep.subr.mxu0 0.0
        %1681 = vmatpush1.msra.mxu0 %v1657
        %1682 = vmatprep.subr.mxu0 0.0
        %1683 = vmatpush1.msra.mxu0 %v1658
        %1684 = vmatprep.subr.mxu0 0.0
        %1685 = vmatpush1.msra.mxu0 %v1659
        %1686 = vmatprep.subr.mxu0 0.0
        %1687 = vmatpush1.msra.mxu0 %v1660
        %1688 = vmatprep.subr.mxu0 0.0
        %1689 = vmatpush1.msra.mxu0 %v1661
        %1690 = vmatprep.subr.mxu0 0.0
        %1691 = vmatpush1.msra.mxu0 %v1662
        %1692 = vmatprep.subr.mxu0 0.0
        %1693 = vmatpush1.msra.mxu0 %v1663
        %1694 = vmatprep.subr.mxu0 0.0
        %1695 = vmatpush1.msra.mxu0 %v1664
        %1696 = vmatprep.subr.mxu0 0.0
        %1697 = vmatpush1.msra.mxu0 %v1665
        %1698 = vmatprep.subr.mxu0 0.0
        %1699 = vmatpush1.msra.mxu0 %v1666
        %1700 = vmatprep.subr.mxu0 0.0
        %1701 = vmatpush1.msra.mxu0 0.0
        %1702 = vmatprep.subr.mxu0 0.0
        %1703 = vmatpush1.msra.mxu0 0.0
        %1704 = vmatprep.subr.mxu0 0.0
        %1705 = vmatpush1.msra.mxu0 0.0
        %1706 = vmatprep.subr.mxu0 0.0
        %1707 = vmatpush1.msra.mxu0 0.0
        %1708 = vmatprep.subr.mxu0 0.0
        %1709 = vmatpush1.msra.mxu0 0.0
        %1710 = vmatprep.subr.mxu0 0.0
        %1711 = vmatpush1.msra.mxu0 0.0
        %1712 = vmatprep.subr.mxu0 0.0
        %1713 = vmatpush1.msra.mxu0 0.0
        %1714 = vmatprep.subr.mxu0 0.0
        %1715 = vmatpush1.msra.mxu0 0.0
        %1716 = vmatprep.subr.mxu0 0.0
        %1717 = vmatpush1.msra.mxu0 0.0
        %1718 = vmatprep.subr.mxu0 0.0
        %1719 = vmatpush1.msra.mxu0 0.0
        %1720 = vmatprep.subr.mxu0 0.0
        %1721 = vmatpush1.msra.mxu0 0.0
        %1722 = vmatprep.subr.mxu0 0.0
        %1723 = vmatpush1.msra.mxu0 0.0
        %1724 = vmatprep.subr.mxu0 0.0
        %1725 = vmatpush1.msra.mxu0 0.0
        %1726 = vmatprep.subr.mxu0 0.0
        %1727 = vmatpush1.msra.mxu0 0.0
        %1728 = vmatprep.subr.mxu0 0.0
        %1729 = vmatpush1.msra.mxu0 0.0
        %1730 = vmatprep.subr.mxu0 0.0
        %1731 = vmatpush1.msra.mxu0 0.0
        %1732 = vmatprep.mubr.f32.mxu0 0.0
        %1733 = vmatmul.mubr.f32.gmra.mrb[0].mxu0 %v1650
        %v1734 = vpop.f32.mrb[0].mxu0
        %v1735 = vadd.f32 %v1667, %v1734
        %v1736 = vpop.f32.mrb[0].mxu0
        %1737 = vdwg.mxu0
        %vm1738 = vcmp.gt.f32.partialorder %v1735, 20.0
        %v1739 = vmin.f32 %v1735, 20.0
        %v1740 = vmul.f32 %v1739, 1.442695
        %v1741 = vpow.pop %v1740
        %v1742 = vadd.f32 %v1741, 1.0
        %v1743 = vlog2.pop %v1742
        %v1744 = vmul.f32 %v1743, 0.6931472
        %v1745 = vmul.f32 -0.5, %v1741
        %v1746 = vadd.f32 %v1745, 1.0
        %v1747 = vmul.f32 %v1746, %v1741
        %v1748 = vand.u32 2147483647, %v1741
        %vm1749 = vcmp.lt.f32.partialorder %v1748, 0.0004427343
        %v1750 = vsel %vm1749, %v1747, %v1744
        %v1751 = vsel %vm1738, %v1735, %v1750
        %v1752 = vadd.f32 %v1751, 0.01
        %v1753 = vld [vmem:[%s287] sm:$0x1]
        %v1756 = vunpack.c.l.s4 1966171168
        %v1757 = vunpack.c.0.s8 %v1756
        %v1758 = vlaneseq
        %v1759 = vshrl.u32 %v1758, 7
        %v1760 = vsub.s32 %v1757, %v1759
        %v1761 = vrot.slane %v1752, %v1760
        %v1763 = vunpack.c.l.s4 1966171168
        %v1764 = vunpack.c.0.s8 %v1763
        %v1765 = vlaneseq
        %v1766 = vshrl.u32 %v1765, 7
        %v1767 = vsub.s32 %v1764, %v1766
        %v1768 = vrot.slane %v1761, %v1767
        %1769 = vrot.lane.b32.xlu0 %v1768, 120
        %v1770 = vpop.permute.xlu0 %1769
        %v1772 = vmul.f32 %v1753, %v1770
        %v1773 = vadd.f32 %v1735, %v1772
        %v1774 = vlaneseq
        %v1775 = vand.u32 %v1774, 127
        %vm1776 = vcmask 57344
        %v1777 = vsel %vm1776, %v1773, -inf
        %1778 = vmax.xlane.f32.xlu0 %v1777
        %v1779 = vpop.xlane.xlu0 %1778
        %vm1780 = vcmp.eq.f32.partialorder %v1773, %v1779
        %v1781 = vsel %vm1780, %v1775, 8
        %v1782 = vsel %vm1776, %v1781, 2147483647
        %v1783 = vand.u32 %v1782, 65535
        %v1784 = vshra.s32 %v1782, 16
        %v1785 = vcvt.s32.f32 %v1783
        %v1786 = vcvt.s32.f32 %v1784
        %1787 = vmin.xlane.f32.xlu0 %v1786
        %v1788 = vpop.xlane.xlu0 %1787
        %vm1789 = vcmp.eq.f32.partialorder %v1786, %v1788
        %v1790 = vsel %vm1789, %v1785, inf
        %1791 = vmin.xlane.f32.xlu0 %v1790
        %v1792 = vpop.xlane.xlu0 %1791
        %v1793 = vcvt.f32.s32 %v1792
        %v1794 = vcvt.f32.s32 %v1788
        %v1795 = vshll.u32 %v1794, 16
        %v1796 = vadd.s32 %v1795, %v1793
        %vm1797 = vcmp.eq.s32.totalorder %v1775, %v1796
        %v1798 = vsel %vm1797, -inf, %v1773
        %v1799 = vsel %vm1776, %v1798, -inf
        %1800 = vmax.xlane.f32.xlu0 %v1799
        %v1801 = vpop.xlane.xlu0 %1800
        %vm1802 = vcmp.eq.f32.partialorder %v1798, %v1801
        %v1803 = vsel %vm1802, %v1775, 8
        %v1804 = vsel %vm1776, %v1803, 2147483647
        %v1805 = vand.u32 %v1804, 65535
        %v1806 = vshra.s32 %v1804, 16
        %v1807 = vcvt.s32.f32 %v1805
        %v1808 = vcvt.s32.f32 %v1806
        %1809 = vmin.xlane.f32.xlu0 %v1808
        %v1810 = vpop.xlane.xlu0 %1809
        %vm1811 = vcmp.eq.f32.partialorder %v1808, %v1810
        %v1812 = vsel %vm1811, %v1807, inf
        %1813 = vmin.xlane.f32.xlu0 %v1812
        %v1814 = vpop.xlane.xlu0 %1813
        %v1815 = vcvt.f32.s32 %v1814
        %v1816 = vcvt.f32.s32 %v1810
        %v1817 = vshll.u32 %v1816, 16
        %v1818 = vadd.s32 %v1817, %v1815
        %v1819 = vmax.f32 %v1779, %v1801
        %v1820 = vsub.f32 %v1779, %v1819
        %v1821 = vmul.f32 %v1820, 1.442695
        %v1822 = vpow.pop %v1821
        %v1823 = vsub.f32 %v1801, %v1819
        %v1824 = vmul.f32 %v1823, 1.442695
        %v1825 = vpow.pop %v1824
        %v1826 = vadd.f32 %v1822, %v1825
        %v1827 = vrcp.pop %v1826
        %v1828 = vmul.f32 %v1822, %v1827
        %v1829 = vsel %vm1797, %v1828, 0.0
        %v1830 = vadd.f32 %v1829, 0.0
        %vm1831 = vcmp.eq.s32.totalorder %v1775, %v1818
        %v1832 = vmul.f32 %v1825, %v1827
        %v1833 = vsel %vm1831, %v1832, 0.0
        %v1834 = vadd.f32 %v1830, %v1833
        %1835 = vst [vmem:[%s277] sm:$0x1] %v1834
        %v1836 = vld [vmem:[%s7] sm:$0x1]
        %v1837 = vadd.f32 %v1836, %v1834
        %1838 = vst [vmem:[%s7] sm:$0x1] %v1837
        %s1839 = sand.u32 %s166, 1
        %s1840 = scalar_lea.sflag [#allocation4], %s1839
        %s1841 = sand.u32 %s166, 1
        %s1842 = scalar_lea.vmem [#allocation3], %s1841
        // Predicated region
        $region49: #{noisy_topk_gating.1} parent=43 // pred_check
          %p1843 = pneg %p176
        $region50: #{noisy_topk_gating.1} parent=43 // pred_check_branch
          %1845 = sbr.rel (%p1843) target = $region52
        $region51: #{noisy_topk_gating.1} parent=43 // pred_region
          %s1847 = ssub.s32 16, 16
          %1848 = vsyncadd %s1840, %s1847
          %s1849 = smul.addr %s22, 16
          %s1850 = scalar_lea.hbm %s6, %s1849
          %s1852 = sshll.u32 %s1842, 4
          %s1853 = int_to_ptr.vmem [resolvable:$true] %s1852
          %1855 = dma.vmem_to_hbm [thread:$0]  %s1853, 16, %s1850, %s1840
        $region52: #{noisy_topk_gating.1} parent=43 // pred_fallthru
          _
        // Predicated region
        $region53: #{noisy_topk_gating.1} parent=43 // pred_check
          %p1856 = pneg %p197
        $region54: #{noisy_topk_gating.1} parent=43 // pred_check_branch
          %1858 = sbr.rel (%p1856) target = $region56
        $region55: #{noisy_topk_gating.1} parent=43 // pred_region
          _
        $region56: #{noisy_topk_gating.1} parent=43 // pred_fallthru
          _
        // Predicated region
        $region57: #{noisy_topk_gating.1} parent=43 // pred_check
          %p1859 = pneg %p197
        $region58: #{noisy_topk_gating.1} parent=43 // pred_check_branch
          %1861 = sbr.rel (%p1859) target = $region60
        $region59: #{noisy_topk_gating.1} parent=43 // pred_region
          _
        $region60: #{noisy_topk_gating.1} parent=43 // pred_fallthru
          _
      $region44: #{noisy_topk_gating.1} parent=5 // pred_fallthru
        _
      %p1862 = scmp.le.s32.totalorder 2, %s17
      // Predicated region
      $region61: #{noisy_topk_gating.1} parent=5 // pred_check
        %p1863 = pneg %p1862
      $region62: #{noisy_topk_gating.1} parent=5 // pred_check_branch
        %1865 = sbr.rel (%p1863) target = $region64
      $region63: #{noisy_topk_gating.1} parent=5 // pred_region
        %s1866 = ssub.s32 %s17, 2
        // Predicated region
        $region65: #{noisy_topk_gating.1} parent=63 // pred_check
          %p1867 = pneg %p182
        $region66: #{noisy_topk_gating.1} parent=63 // pred_check_branch
          %1869 = sbr.rel (%p1867) target = $region68
        $region67: #{noisy_topk_gating.1} parent=63 // pred_region
          %s1870 = sand.u32 %s167, 1
          %s1871 = scalar_lea.sflag [#allocation4], %s1870
          %s1872 = sand.u32 %s167, 1
          %s1873 = scalar_lea.vmem [#allocation3], %s1872
          %1874 = dma.done %s1871, 16
        $region68: #{noisy_topk_gating.1} parent=63 // pred_fallthru
          _
      $region64: #{noisy_topk_gating.1} parent=5 // pred_fallthru
        _
    $region6: #{noisy_topk_gating.1} parent=1 // loop_footer
      %s21 = sadd.s32 1, %s17
    $region7: #{noisy_topk_gating.1} parent=1 // loop_footer_branch
      %16 = sbr.rel target = $region3
    $region8: #{noisy_topk_gating.1} parent=1 // loop_exit
      _
    %1875 = vsyncpa [#allocation4], 1
    %s1876 = scalar_lea.sflag [#allocation4], 1
    %1877 = vsyncpa %s1876, 1

</llo_original>
